<compile_context>
chip_gen: v5e
topology: v5e:2x2
jax: 0.10.0
libtpu: 0.0.40
codegen_flags: <defaults>
</compile_context>

<pallas_src>
import jax
import jax.numpy as jnp
from jax.experimental import pallas as pl
from jax.experimental.pallas import tpu as pltpu

EPS = 1e-5


def relu_conv1x1_bn_kernel(x_ref, w_ref, g_ref, b_ref, o_ref):
    # x_ref: (Cin, M)   bf16   -- input in (channel, spatial) layout
    # w_ref: (Cout, Cin) bf16  -- 1x1 conv weight, no transpose needed
    # g_ref: (Cout, 1)  f32    -- BN gamma
    # b_ref: (Cout, 1)  f32    -- BN beta
    # o_ref: (Cout, M)  f32
    x = jnp.maximum(x_ref[...], 0)                              # ReLU (VPU, bf16)
    y = jnp.dot(w_ref[...], x,
                preferred_element_type=jnp.float32)             # 1x1 conv == matmul (MXU)

    m = y.shape[1]
    inv_m = 1.0 / m
    # One-pass batch stats over the spatial axis (XLU reductions).
    s1 = jnp.sum(y, axis=1, keepdims=True)                      # (Cout, 1)
    s2 = jnp.sum(y * y, axis=1, keepdims=True)                  # (Cout, 1)
    mean = s1 * inv_m
    var = s2 * inv_m - mean * mean                              # biased var (PyTorch BN, train mode)
    inv_std = jax.lax.rsqrt(var + EPS)

    # Fold BN affine into a single scale/shift -> one FMA-like pass over y.
    scale = g_ref[...] * inv_std                                # (Cout, 1)
    shift = b_ref[...] - mean * scale                           # (Cout, 1)
    o_ref[...] = y * scale + shift


def relu_conv1x1_bn(x_nchw, conv_w, gamma, beta):
    """x_nchw: (N, Cin, H, W); conv_w: (Cout, Cin, 1, 1); gamma/beta: (Cout,)."""
    N, Cin, H, W = x_nchw.shape
    Cout = conv_w.shape[0]
    M = N * H * W

    # (N, Cin, H, W) -> (Cin, M). For N == 1 this is a pure reshape (no data
    # movement); general N needs one moveaxis.
    if N == 1:
        x2d = x_nchw.reshape(Cin, M)
    else:
        x2d = jnp.moveaxis(x_nchw, 1, 0).reshape(Cin, M)
    x2d = x2d.astype(jnp.bfloat16)                     # bf16 operands, f32 MXU accumulation
    w2d = conv_w.reshape(Cout, Cin).astype(jnp.bfloat16)
    g2d = gamma.reshape(Cout, 1).astype(jnp.float32)
    b2d = beta.reshape(Cout, 1).astype(jnp.float32)

    cost = pl.CostEstimate(
        flops=2 * M * Cin * Cout + 10 * M * Cout,
        transcendentals=Cout,
        bytes_accessed=(Cin * M * 2) + (Cout * Cin * 2) + 2 * (Cout * 4) + (Cout * M * 4),
    )

    # Whole problem (~1.2 MB) fits comfortably in VMEM on v5e/v6e/v7x, so a
    # single grid step with full-array blocks is the right granularity.
    # TODO(synk): if M ever grows large, tile M with a two-pass BN (accumulate
    # sum/sum-sq in scratch, normalize in pass 2) and mark the M axis "parallel".
    out2d = pl.pallas_call(
        relu_conv1x1_bn_kernel,
        out_shape=jax.ShapeDtypeStruct((Cout, M), jnp.float32),
        grid=(1,),
        in_specs=[
            pl.BlockSpec((Cin, M), lambda i: (0, 0)),
            pl.BlockSpec((Cout, Cin), lambda i: (0, 0)),
            pl.BlockSpec((Cout, 1), lambda i: (0, 0)),
            pl.BlockSpec((Cout, 1), lambda i: (0, 0)),
        ],
        out_specs=pl.BlockSpec((Cout, M), lambda i: (0, 0)),
        compiler_params=pltpu.CompilerParams(
            dimension_semantics=("arbitrary",)),
        cost_estimate=cost,
    )(x2d, w2d, g2d, b2d)

    # (Cout, M) -> (N, Cout, H, W). For N == 1 this is again a pure reshape.
    out = out2d.reshape(Cout, N, H, W)
    if N == 1:
        return out2d.reshape(N, Cout, H, W)
    return jnp.moveaxis(out, 1, 0)


if __name__ == "__main__":
    key = jax.random.PRNGKey(0)
    kx, kw = jax.random.split(key)

    # Shapes from the module: input (1, 624, 14, 14), Conv2d(624, 192, 1x1, bias=False)
    N, Cin, H, W = 1, 624, 14, 14
    Cout = 192

    x = jax.random.normal(kx, (N, Cin, H, W), dtype=jnp.float32)
    # Deterministic conv weight init (kaiming-uniform-ish scale)
    fan_in = Cin
    bound = (1.0 / fan_in) ** 0.5
    conv_w = jax.random.uniform(kw, (Cout, Cin, 1, 1),
                                minval=-bound, maxval=bound, dtype=jnp.float32)
    # BatchNorm2d affine params: PyTorch default init gamma=1, beta=0
    gamma = jnp.ones((Cout,), dtype=jnp.float32)
    beta = jnp.zeros((Cout,), dtype=jnp.float32)

    out = relu_conv1x1_bn(x, conv_w, gamma, beta)
    out = jax.block_until_ready(out)

    # Sanity check vs pure-JAX f32 reference (training-mode BN with batch stats).
    # Tolerance is set for the bf16 matmul operands (f32 accumulation).
    xr = jnp.maximum(x, 0.0)
    y_ref = jnp.einsum('oc,nchw->nohw', conv_w.reshape(Cout, Cin), xr)
    mu = jnp.mean(y_ref, axis=(0, 2, 3), keepdims=True)
    var = jnp.mean((y_ref - mu) ** 2, axis=(0, 2, 3), keepdims=True)
    ref = (y_ref - mu) * jax.lax.rsqrt(var + EPS) * gamma.reshape(1, Cout, 1, 1) \
        + beta.reshape(1, Cout, 1, 1)
    assert out.shape == (N, Cout, H, W)
    assert jnp.allclose(out, ref, atol=3e-2, rtol=3e-2)

    print("KERNEL_OK")
</pallas_src>

<mosaic_0001>
module attributes {stable_mosaic.version = 11 : i64} {
  func.func @relu_conv1x1_bn_kernel(%arg0: i32, %arg1: memref<624x196xbf16, #tpu.memory_space<vmem>>, %arg2: memref<192x624xbf16, #tpu.memory_space<vmem>>, %arg3: memref<192x1xf32, #tpu.memory_space<vmem>>, %arg4: memref<192x1xf32, #tpu.memory_space<vmem>>, %arg5: memref<192x196xf32, #tpu.memory_space<vmem>>) attributes {dimension_semantics = [#tpu.dimension_semantics<arbitrary>], iteration_bounds = array<i64: 1>, scalar_prefetch = 0 : i64, scratch_operands = 0 : i64, tpu.core_type = #tpu.core_type<tc>, window_params = [{pipeline_mode = #tpu.pipeline_mode<synchronous>, transform_indices = @transform_0, window_bounds = array<i64: 624, 196>}, {pipeline_mode = #tpu.pipeline_mode<synchronous>, transform_indices = @transform_1, window_bounds = array<i64: 192, 624>}, {pipeline_mode = #tpu.pipeline_mode<synchronous>, transform_indices = @transform_2, window_bounds = array<i64: 192, 1>}, {pipeline_mode = #tpu.pipeline_mode<synchronous>, transform_indices = @transform_3, window_bounds = array<i64: 192, 1>}, {pipeline_mode = #tpu.pipeline_mode<synchronous>, transform_indices = @transform_4, window_bounds = array<i64: 192, 196>}]} {
    %c0 = arith.constant 0 : index
    %c0_0 = arith.constant 0 : index
    %0 = vector.load %arg1[%c0, %c0_0] : memref<624x196xbf16, #tpu.memory_space<vmem>>, vector<624x196xbf16>
    %cst = arith.constant 0.000000e+00 : bf16
    %1 = vector.broadcast %cst : bf16 to vector<624x196xbf16>
    %2 = arith.maximumf %0, %1 : vector<624x196xbf16>
    %c0_1 = arith.constant 0 : index
    %c0_2 = arith.constant 0 : index
    %3 = vector.load %arg2[%c0_1, %c0_2] : memref<192x624xbf16, #tpu.memory_space<vmem>>, vector<192x624xbf16>
    %cst_3 = arith.constant dense<0.000000e+00> : vector<192x196xf32>
    %4 = tpu.matmul %3, %2, %cst_3 {dimension_numbers = #tpu.dot_dimension_numbers<[1], [0], [0], [1], [0, 0, 1, 1], [], []>} : vector<192x624xbf16>, vector<624x196xbf16>, vector<192x196xf32> -> vector<192x196xf32>
    %cst_4 = arith.constant dense<0.000000e+00> : vector<192xf32>
    %5 = vector.multi_reduction <add>, %4, %cst_4 [1] : vector<192x196xf32> to vector<192xf32>
    %6 = vector.shape_cast %5 : vector<192xf32> to vector<192x1xf32>
    %7 = arith.mulf %4, %4 : vector<192x196xf32>
    %cst_5 = arith.constant dense<0.000000e+00> : vector<192xf32>
    %8 = vector.multi_reduction <add>, %7, %cst_5 [1] : vector<192x196xf32> to vector<192xf32>
    %9 = vector.shape_cast %8 : vector<192xf32> to vector<192x1xf32>
    %cst_6 = arith.constant 0.00510204071 : f32
    %10 = vector.broadcast %cst_6 : f32 to vector<192x1xf32>
    %11 = arith.mulf %6, %10 : vector<192x1xf32>
    %cst_7 = arith.constant 0.00510204071 : f32
    %12 = vector.broadcast %cst_7 : f32 to vector<192x1xf32>
    %13 = arith.mulf %9, %12 : vector<192x1xf32>
    %14 = arith.mulf %11, %11 : vector<192x1xf32>
    %15 = arith.subf %13, %14 : vector<192x1xf32>
    %cst_8 = arith.constant 9.99999974E-6 : f32
    %16 = vector.broadcast %cst_8 : f32 to vector<192x1xf32>
    %17 = arith.addf %15, %16 : vector<192x1xf32>
    %18 = math.rsqrt %17 : vector<192x1xf32>
    %c0_9 = arith.constant 0 : index
    %c0_10 = arith.constant 0 : index
    %19 = vector.load %arg3[%c0_9, %c0_10] : memref<192x1xf32, #tpu.memory_space<vmem>>, vector<192x1xf32>
    %20 = arith.mulf %19, %18 : vector<192x1xf32>
    %c0_11 = arith.constant 0 : index
    %c0_12 = arith.constant 0 : index
    %21 = vector.load %arg4[%c0_11, %c0_12] : memref<192x1xf32, #tpu.memory_space<vmem>>, vector<192x1xf32>
    %22 = arith.mulf %11, %20 : vector<192x1xf32>
    %23 = arith.subf %21, %22 : vector<192x1xf32>
    %24 = vector.broadcast %20 : vector<192x1xf32> to vector<192x196xf32>
    %25 = arith.mulf %4, %24 : vector<192x196xf32>
    %26 = vector.broadcast %23 : vector<192x1xf32> to vector<192x196xf32>
    %27 = arith.addf %25, %26 : vector<192x196xf32>
    %c0_13 = arith.constant 0 : index
    %c0_14 = arith.constant 0 : index
    %28 = vector.load %arg5[%c0_13, %c0_14] : memref<192x196xf32, #tpu.memory_space<vmem>>, vector<192x196xf32>
    tpu.vector_store %arg5[%c0_13, %c0_14], %27 {strides = array<i32>} : memref<192x196xf32, #tpu.memory_space<vmem>>, vector<192x196xf32>,
    return
  }
  func.func @transform_0(%arg0: i32) -> (i32, i32) {
    %c0_i32 = arith.constant 0 : i32
    %c0_i32_0 = arith.constant 0 : i32
    %c0_i32_1 = arith.constant 0 : i32
    return %c0_i32, %c0_i32_0 : i32, i32
  }
  func.func @transform_1(%arg0: i32) -> (i32, i32) {
    %c0_i32 = arith.constant 0 : i32
    %c0_i32_0 = arith.constant 0 : i32
    %c0_i32_1 = arith.constant 0 : i32
    return %c0_i32, %c0_i32_0 : i32, i32
  }
  func.func @transform_2(%arg0: i32) -> (i32, i32) {
    %c0_i32 = arith.constant 0 : i32
    %c0_i32_0 = arith.constant 0 : i32
    %c0_i32_1 = arith.constant 0 : i32
    return %c0_i32, %c0_i32_0 : i32, i32
  }
  func.func @transform_3(%arg0: i32) -> (i32, i32) {
    %c0_i32 = arith.constant 0 : i32
    %c0_i32_0 = arith.constant 0 : i32
    %c0_i32_1 = arith.constant 0 : i32
    return %c0_i32, %c0_i32_0 : i32, i32
  }
  func.func @transform_4(%arg0: i32) -> (i32, i32) {
    %c0_i32 = arith.constant 0 : i32
    %c0_i32_0 = arith.constant 0 : i32
    %c0_i32_1 = arith.constant 0 : i32
    return %c0_i32, %c0_i32_0 : i32, i32
  }
}

</mosaic_0001>

<llo_original>
// kernel: tpu_custom_call.1
$region0: #{tpu_custom_call.1}
  #allocation0 [shape = 'u32[]', space=smem, size = 0x4, offset = 0x4, fixed_abs, tag = 'smem constant byte address 0x4 - core index']
  #allocation1 [shape = 'u32[72,128]{1,0:T(1,128)}', space=vmem, size = 0x9000, scoped, tag = 'internal scratch']
  %s0 = inlined_call_operand.vmem [shape: bf16[624,196], index: 0, kind: input, shape index: {}]
  %s1 = inlined_call_operand.vmem [shape: bf16[192,624], index: 1, kind: input, shape index: {}]
  %s2 = inlined_call_operand.vmem [shape: f32[192,1], index: 2, kind: input, shape index: {}]
  %s3 = inlined_call_operand.vmem [shape: f32[192,1], index: 3, kind: input, shape index: {}]
  %s4 = inlined_call_operand.hbm [shape: f32[192,196], index: 4, kind: output, shape index: {}]
  %s5 = sld [smem:[#allocation0]]
  $region26: #{tpu_custom_call.1} parent=0
    _
  %s7 = ssub.s32 1, %s5
  %s8 = scalar_select 0, %s7, %s5
  $region1: #{tpu_custom_call.1} parent=0
    #allocation2 [shape = 'u8[196608]{0}', space=vmem, size = 0x30000, scoped, tag = 'output window, operand 0, single buffered']
    #allocation3 [shape = 's32[1]{0}', space=sflag, size = 0x4, scoped, tag = 'scoped memory for tpu_custom_call.1']
    %9 = vsyncpa [#allocation3], 0
    // Predicated region
    $region2: #{tpu_custom_call.1} parent=1 // pred_check
      _
    $region3: #{tpu_custom_call.1} parent=1 // pred_check_branch
      %11 = sbr.rel (0) target = $region5
    $region4: #{tpu_custom_call.1} parent=1 // pred_region
      _
    $region5: #{tpu_custom_call.1} parent=1 // pred_fallthru
      _
    // Predicated region
    $region6: #{tpu_custom_call.1} parent=1 // pred_check
      _
    $region7: #{tpu_custom_call.1} parent=1 // pred_check_branch
      %13 = sbr.rel (0) target = $region9
    $region8: #{tpu_custom_call.1} parent=1 // pred_region
      _
    $region9: #{tpu_custom_call.1} parent=1 // pred_fallthru
      _
    // Predicated region
    $region10: #{tpu_custom_call.1} parent=1 // pred_check
      _
    $region11: #{tpu_custom_call.1} parent=1 // pred_check_branch
      %15 = sbr.rel (0) target = $region13
    $region12: #{tpu_custom_call.1} parent=1 // pred_region
      _
    $region13: #{tpu_custom_call.1} parent=1 // pred_fallthru
      _
    // Predicated region
    $region14: #{tpu_custom_call.1} parent=1 // pred_check
      _
    $region15: #{tpu_custom_call.1} parent=1 // pred_check_branch
      %17 = sbr.rel (0) target = $region17
    $region16: #{tpu_custom_call.1} parent=1 // pred_region
      _
    $region17: #{tpu_custom_call.1} parent=1 // pred_fallthru
      _
    %v19 = vld [vmem:[%s0] sm:$0xff]
    %v20 = vld [vmem:[%s0 + $0x8] sm:$0xff]
    %v21 = vld [vmem:[%s0 + $0x10] sm:$0xff]
    %v22 = vld [vmem:[%s0 + $0x18] sm:$0xff]
    %v23 = vld [vmem:[%s0 + $0x20] sm:$0xff]
    %v24 = vld [vmem:[%s0 + $0x28] sm:$0xff]
    %v25 = vld [vmem:[%s0 + $0x30] sm:$0xff]
    %v26 = vld [vmem:[%s0 + $0x38] sm:$0xff]
    %v27 = vld [vmem:[%s0 + $0x40] sm:$0xff]
    %v28 = vld [vmem:[%s0 + $0x48] sm:$0xff]
    %v29 = vld [vmem:[%s0 + $0x50] sm:$0xff]
    %v30 = vld [vmem:[%s0 + $0x58] sm:$0xff]
    %v31 = vld [vmem:[%s0 + $0x60] sm:$0xff]
    %v32 = vld [vmem:[%s0 + $0x68] sm:$0xff]
    %v33 = vld [vmem:[%s0 + $0x70] sm:$0xff]
    %v34 = vld [vmem:[%s0 + $0x78] sm:$0xff]
    %v35 = vld [vmem:[%s0 + $0x80] sm:$0xff]
    %v36 = vld [vmem:[%s0 + $0x88] sm:$0xff]
    %v37 = vld [vmem:[%s0 + $0x90] sm:$0xff]
    %v38 = vld [vmem:[%s0 + $0x98] sm:$0xff]
    %v39 = vld [vmem:[%s0 + $0xa0] sm:$0xff]
    %v40 = vld [vmem:[%s0 + $0xa8] sm:$0xff]
    %v41 = vld [vmem:[%s0 + $0xb0] sm:$0xff]
    %v42 = vld [vmem:[%s0 + $0xb8] sm:$0xff]
    %v43 = vld [vmem:[%s0 + $0xc0] sm:$0xff]
    %v44 = vld [vmem:[%s0 + $0xc8] sm:$0xff]
    %v45 = vld [vmem:[%s0 + $0xd0] sm:$0xff]
    %v46 = vld [vmem:[%s0 + $0xd8] sm:$0xff]
    %v47 = vld [vmem:[%s0 + $0xe0] sm:$0xff]
    %v48 = vld [vmem:[%s0 + $0xe8] sm:$0xff]
    %v49 = vld [vmem:[%s0 + $0xf0] sm:$0xff]
    %v50 = vld [vmem:[%s0 + $0xf8] sm:$0xff]
    %v51 = vld [vmem:[%s0 + $0x100] sm:$0xff]
    %v52 = vld [vmem:[%s0 + $0x108] sm:$0xff]
    %v53 = vld [vmem:[%s0 + $0x110] sm:$0xff]
    %v54 = vld [vmem:[%s0 + $0x118] sm:$0xff]
    %v55 = vld [vmem:[%s0 + $0x120] sm:$0xff]
    %v56 = vld [vmem:[%s0 + $0x128] sm:$0xff]
    %v57 = vld [vmem:[%s0 + $0x130] sm:$0xff]
    %v58 = vld [vmem:[%s0 + $0x138] sm:$0xff]
    %v59 = vld [vmem:[%s0 + $0x140] sm:$0xff]
    %v60 = vld [vmem:[%s0 + $0x148] sm:$0xff]
    %v61 = vld [vmem:[%s0 + $0x150] sm:$0xff]
    %v62 = vld [vmem:[%s0 + $0x158] sm:$0xff]
    %v63 = vld [vmem:[%s0 + $0x160] sm:$0xff]
    %v64 = vld [vmem:[%s0 + $0x168] sm:$0xff]
    %v65 = vld [vmem:[%s0 + $0x170] sm:$0xff]
    %v66 = vld [vmem:[%s0 + $0x178] sm:$0xff]
    %v67 = vld [vmem:[%s0 + $0x180] sm:$0xff]
    %v68 = vld [vmem:[%s0 + $0x188] sm:$0xff]
    %v69 = vld [vmem:[%s0 + $0x190] sm:$0xff]
    %v70 = vld [vmem:[%s0 + $0x198] sm:$0xff]
    %v71 = vld [vmem:[%s0 + $0x1a0] sm:$0xff]
    %v72 = vld [vmem:[%s0 + $0x1a8] sm:$0xff]
    %v73 = vld [vmem:[%s0 + $0x1b0] sm:$0xff]
    %v74 = vld [vmem:[%s0 + $0x1b8] sm:$0xff]
    %v75 = vld [vmem:[%s0 + $0x1c0] sm:$0xff]
    %v76 = vld [vmem:[%s0 + $0x1c8] sm:$0xff]
    %v77 = vld [vmem:[%s0 + $0x1d0] sm:$0xff]
    %v78 = vld [vmem:[%s0 + $0x1d8] sm:$0xff]
    %v79 = vld [vmem:[%s0 + $0x1e0] sm:$0xff]
    %v80 = vld [vmem:[%s0 + $0x1e8] sm:$0xff]
    %v81 = vld [vmem:[%s0 + $0x1f0] sm:$0xff]
    %v82 = vld [vmem:[%s0 + $0x1f8] sm:$0xff]
    %v83 = vld [vmem:[%s0 + $0x200] sm:$0xff]
    %v84 = vld [vmem:[%s0 + $0x208] sm:$0xff]
    %v85 = vld [vmem:[%s0 + $0x210] sm:$0xff]
    %v86 = vld [vmem:[%s0 + $0x218] sm:$0xff]
    %v87 = vld [vmem:[%s0 + $0x220] sm:$0xff]
    %v88 = vld [vmem:[%s0 + $0x228] sm:$0xff]
    %v89 = vld [vmem:[%s0 + $0x230] sm:$0xff]
    %v90 = vld [vmem:[%s0 + $0x238] sm:$0xff]
    %v91 = vld [vmem:[%s0 + $0x240] sm:$0xff]
    %v92 = vld [vmem:[%s0 + $0x248] sm:$0xff]
    %v93 = vld [vmem:[%s0 + $0x250] sm:$0xff]
    %v94 = vld [vmem:[%s0 + $0x258] sm:$0xff]
    %v95 = vld [vmem:[%s0 + $0x260] sm:$0xff]
    %v96 = vld [vmem:[%s0 + $0x268] sm:$0xff]
    %v97 = vunpack.c.l.bf16 %v19
    %v98 = vunpack.c.h.bf16 %v19
    %v99 = vunpack.c.l.bf16 %v20
    %v100 = vunpack.c.h.bf16 %v20
    %v101 = vunpack.c.l.bf16 %v21
    %v102 = vunpack.c.h.bf16 %v21
    %v103 = vunpack.c.l.bf16 %v22
    %v104 = vunpack.c.h.bf16 %v22
    %v105 = vunpack.c.l.bf16 %v23
    %v106 = vunpack.c.h.bf16 %v23
    %v107 = vunpack.c.l.bf16 %v24
    %v108 = vunpack.c.h.bf16 %v24
    %v109 = vunpack.c.l.bf16 %v25
    %v110 = vunpack.c.h.bf16 %v25
    %v111 = vunpack.c.l.bf16 %v26
    %v112 = vunpack.c.h.bf16 %v26
    %v113 = vunpack.c.l.bf16 %v27
    %v114 = vunpack.c.h.bf16 %v27
    %v115 = vunpack.c.l.bf16 %v28
    %v116 = vunpack.c.h.bf16 %v28
    %v117 = vunpack.c.l.bf16 %v29
    %v118 = vunpack.c.h.bf16 %v29
    %v119 = vunpack.c.l.bf16 %v30
    %v120 = vunpack.c.h.bf16 %v30
    %v121 = vunpack.c.l.bf16 %v31
    %v122 = vunpack.c.h.bf16 %v31
    %v123 = vunpack.c.l.bf16 %v32
    %v124 = vunpack.c.h.bf16 %v32
    %v125 = vunpack.c.l.bf16 %v33
    %v126 = vunpack.c.h.bf16 %v33
    %v127 = vunpack.c.l.bf16 %v34
    %v128 = vunpack.c.h.bf16 %v34
    %v129 = vunpack.c.l.bf16 %v35
    %v130 = vunpack.c.h.bf16 %v35
    %v131 = vunpack.c.l.bf16 %v36
    %v132 = vunpack.c.h.bf16 %v36
    %v133 = vunpack.c.l.bf16 %v37
    %v134 = vunpack.c.h.bf16 %v37
    %v135 = vunpack.c.l.bf16 %v38
    %v136 = vunpack.c.h.bf16 %v38
    %v137 = vunpack.c.l.bf16 %v39
    %v138 = vunpack.c.h.bf16 %v39
    %v139 = vunpack.c.l.bf16 %v40
    %v140 = vunpack.c.h.bf16 %v40
    %v141 = vunpack.c.l.bf16 %v41
    %v142 = vunpack.c.h.bf16 %v41
    %v143 = vunpack.c.l.bf16 %v42
    %v144 = vunpack.c.h.bf16 %v42
    %v145 = vunpack.c.l.bf16 %v43
    %v146 = vunpack.c.h.bf16 %v43
    %v147 = vunpack.c.l.bf16 %v44
    %v148 = vunpack.c.h.bf16 %v44
    %v149 = vunpack.c.l.bf16 %v45
    %v150 = vunpack.c.h.bf16 %v45
    %v151 = vunpack.c.l.bf16 %v46
    %v152 = vunpack.c.h.bf16 %v46
    %v153 = vunpack.c.l.bf16 %v47
    %v154 = vunpack.c.h.bf16 %v47
    %v155 = vunpack.c.l.bf16 %v48
    %v156 = vunpack.c.h.bf16 %v48
    %v157 = vunpack.c.l.bf16 %v49
    %v158 = vunpack.c.h.bf16 %v49
    %v159 = vunpack.c.l.bf16 %v50
    %v160 = vunpack.c.h.bf16 %v50
    %v161 = vunpack.c.l.bf16 %v51
    %v162 = vunpack.c.h.bf16 %v51
    %v163 = vunpack.c.l.bf16 %v52
    %v164 = vunpack.c.h.bf16 %v52
    %v165 = vunpack.c.l.bf16 %v53
    %v166 = vunpack.c.h.bf16 %v53
    %v167 = vunpack.c.l.bf16 %v54
    %v168 = vunpack.c.h.bf16 %v54
    %v169 = vunpack.c.l.bf16 %v55
    %v170 = vunpack.c.h.bf16 %v55
    %v171 = vunpack.c.l.bf16 %v56
    %v172 = vunpack.c.h.bf16 %v56
    %v173 = vunpack.c.l.bf16 %v57
    %v174 = vunpack.c.h.bf16 %v57
    %v175 = vunpack.c.l.bf16 %v58
    %v176 = vunpack.c.h.bf16 %v58
    %v177 = vunpack.c.l.bf16 %v59
    %v178 = vunpack.c.h.bf16 %v59
    %v179 = vunpack.c.l.bf16 %v60
    %v180 = vunpack.c.h.bf16 %v60
    %v181 = vunpack.c.l.bf16 %v61
    %v182 = vunpack.c.h.bf16 %v61
    %v183 = vunpack.c.l.bf16 %v62
    %v184 = vunpack.c.h.bf16 %v62
    %v185 = vunpack.c.l.bf16 %v63
    %v186 = vunpack.c.h.bf16 %v63
    %v187 = vunpack.c.l.bf16 %v64
    %v188 = vunpack.c.h.bf16 %v64
    %v189 = vunpack.c.l.bf16 %v65
    %v190 = vunpack.c.h.bf16 %v65
    %v191 = vunpack.c.l.bf16 %v66
    %v192 = vunpack.c.h.bf16 %v66
    %v193 = vunpack.c.l.bf16 %v67
    %v194 = vunpack.c.h.bf16 %v67
    %v195 = vunpack.c.l.bf16 %v68
    %v196 = vunpack.c.h.bf16 %v68
    %v197 = vunpack.c.l.bf16 %v69
    %v198 = vunpack.c.h.bf16 %v69
    %v199 = vunpack.c.l.bf16 %v70
    %v200 = vunpack.c.h.bf16 %v70
    %v201 = vunpack.c.l.bf16 %v71
    %v202 = vunpack.c.h.bf16 %v71
    %v203 = vunpack.c.l.bf16 %v72
    %v204 = vunpack.c.h.bf16 %v72
    %v205 = vunpack.c.l.bf16 %v73
    %v206 = vunpack.c.h.bf16 %v73
    %v207 = vunpack.c.l.bf16 %v74
    %v208 = vunpack.c.h.bf16 %v74
    %v209 = vunpack.c.l.bf16 %v75
    %v210 = vunpack.c.h.bf16 %v75
    %v211 = vunpack.c.l.bf16 %v76
    %v212 = vunpack.c.h.bf16 %v76
    %v213 = vunpack.c.l.bf16 %v77
    %v214 = vunpack.c.h.bf16 %v77
    %v215 = vunpack.c.l.bf16 %v78
    %v216 = vunpack.c.h.bf16 %v78
    %v217 = vunpack.c.l.bf16 %v79
    %v218 = vunpack.c.h.bf16 %v79
    %v219 = vunpack.c.l.bf16 %v80
    %v220 = vunpack.c.h.bf16 %v80
    %v221 = vunpack.c.l.bf16 %v81
    %v222 = vunpack.c.h.bf16 %v81
    %v223 = vunpack.c.l.bf16 %v82
    %v224 = vunpack.c.h.bf16 %v82
    %v225 = vunpack.c.l.bf16 %v83
    %v226 = vunpack.c.h.bf16 %v83
    %v227 = vunpack.c.l.bf16 %v84
    %v228 = vunpack.c.h.bf16 %v84
    %v229 = vunpack.c.l.bf16 %v85
    %v230 = vunpack.c.h.bf16 %v85
    %v231 = vunpack.c.l.bf16 %v86
    %v232 = vunpack.c.h.bf16 %v86
    %v233 = vunpack.c.l.bf16 %v87
    %v234 = vunpack.c.h.bf16 %v87
    %v235 = vunpack.c.l.bf16 %v88
    %v236 = vunpack.c.h.bf16 %v88
    %v237 = vunpack.c.l.bf16 %v89
    %v238 = vunpack.c.h.bf16 %v89
    %v239 = vunpack.c.l.bf16 %v90
    %v240 = vunpack.c.h.bf16 %v90
    %v241 = vunpack.c.l.bf16 %v91
    %v242 = vunpack.c.h.bf16 %v91
    %v243 = vunpack.c.l.bf16 %v92
    %v244 = vunpack.c.h.bf16 %v92
    %v245 = vunpack.c.l.bf16 %v93
    %v246 = vunpack.c.h.bf16 %v93
    %v247 = vunpack.c.l.bf16 %v94
    %v248 = vunpack.c.h.bf16 %v94
    %v249 = vunpack.c.l.bf16 %v95
    %v250 = vunpack.c.h.bf16 %v95
    %v251 = vunpack.c.l.bf16 %v96
    %v252 = vunpack.c.h.bf16 %v96
    %v253 = vmax.f32 %v97, 0.0
    %v254 = vmax.f32 %v98, 0.0
    %v255 = vmax.f32 %v99, 0.0
    %v256 = vmax.f32 %v100, 0.0
    %v257 = vmax.f32 %v101, 0.0
    %v258 = vmax.f32 %v102, 0.0
    %v259 = vmax.f32 %v103, 0.0
    %v260 = vmax.f32 %v104, 0.0
    %v261 = vmax.f32 %v105, 0.0
    %v262 = vmax.f32 %v106, 0.0
    %v263 = vmax.f32 %v107, 0.0
    %v264 = vmax.f32 %v108, 0.0
    %v265 = vmax.f32 %v109, 0.0
    %v266 = vmax.f32 %v110, 0.0
    %v267 = vmax.f32 %v111, 0.0
    %v268 = vmax.f32 %v112, 0.0
    %v269 = vmax.f32 %v113, 0.0
    %v270 = vmax.f32 %v114, 0.0
    %v271 = vmax.f32 %v115, 0.0
    %v272 = vmax.f32 %v116, 0.0
    %v273 = vmax.f32 %v117, 0.0
    %v274 = vmax.f32 %v118, 0.0
    %v275 = vmax.f32 %v119, 0.0
    %v276 = vmax.f32 %v120, 0.0
    %v277 = vmax.f32 %v121, 0.0
    %v278 = vmax.f32 %v122, 0.0
    %v279 = vmax.f32 %v123, 0.0
    %v280 = vmax.f32 %v124, 0.0
    %v281 = vmax.f32 %v125, 0.0
    %v282 = vmax.f32 %v126, 0.0
    %v283 = vmax.f32 %v127, 0.0
    %v284 = vmax.f32 %v128, 0.0
    %v285 = vmax.f32 %v129, 0.0
    %v286 = vmax.f32 %v130, 0.0
    %v287 = vmax.f32 %v131, 0.0
    %v288 = vmax.f32 %v132, 0.0
    %v289 = vmax.f32 %v133, 0.0
    %v290 = vmax.f32 %v134, 0.0
    %v291 = vmax.f32 %v135, 0.0
    %v292 = vmax.f32 %v136, 0.0
    %v293 = vmax.f32 %v137, 0.0
    %v294 = vmax.f32 %v138, 0.0
    %v295 = vmax.f32 %v139, 0.0
    %v296 = vmax.f32 %v140, 0.0
    %v297 = vmax.f32 %v141, 0.0
    %v298 = vmax.f32 %v142, 0.0
    %v299 = vmax.f32 %v143, 0.0
    %v300 = vmax.f32 %v144, 0.0
    %v301 = vmax.f32 %v145, 0.0
    %v302 = vmax.f32 %v146, 0.0
    %v303 = vmax.f32 %v147, 0.0
    %v304 = vmax.f32 %v148, 0.0
    %v305 = vmax.f32 %v149, 0.0
    %v306 = vmax.f32 %v150, 0.0
    %v307 = vmax.f32 %v151, 0.0
    %v308 = vmax.f32 %v152, 0.0
    %v309 = vmax.f32 %v153, 0.0
    %v310 = vmax.f32 %v154, 0.0
    %v311 = vmax.f32 %v155, 0.0
    %v312 = vmax.f32 %v156, 0.0
    %v313 = vmax.f32 %v157, 0.0
    %v314 = vmax.f32 %v158, 0.0
    %v315 = vmax.f32 %v159, 0.0
    %v316 = vmax.f32 %v160, 0.0
    %v317 = vmax.f32 %v161, 0.0
    %v318 = vmax.f32 %v162, 0.0
    %v319 = vmax.f32 %v163, 0.0
    %v320 = vmax.f32 %v164, 0.0
    %v321 = vmax.f32 %v165, 0.0
    %v322 = vmax.f32 %v166, 0.0
    %v323 = vmax.f32 %v167, 0.0
    %v324 = vmax.f32 %v168, 0.0
    %v325 = vmax.f32 %v169, 0.0
    %v326 = vmax.f32 %v170, 0.0
    %v327 = vmax.f32 %v171, 0.0
    %v328 = vmax.f32 %v172, 0.0
    %v329 = vmax.f32 %v173, 0.0
    %v330 = vmax.f32 %v174, 0.0
    %v331 = vmax.f32 %v175, 0.0
    %v332 = vmax.f32 %v176, 0.0
    %v333 = vmax.f32 %v177, 0.0
    %v334 = vmax.f32 %v178, 0.0
    %v335 = vmax.f32 %v179, 0.0
    %v336 = vmax.f32 %v180, 0.0
    %v337 = vmax.f32 %v181, 0.0
    %v338 = vmax.f32 %v182, 0.0
    %v339 = vmax.f32 %v183, 0.0
    %v340 = vmax.f32 %v184, 0.0
    %v341 = vmax.f32 %v185, 0.0
    %v342 = vmax.f32 %v186, 0.0
    %v343 = vmax.f32 %v187, 0.0
    %v344 = vmax.f32 %v188, 0.0
    %v345 = vmax.f32 %v189, 0.0
    %v346 = vmax.f32 %v190, 0.0
    %v347 = vmax.f32 %v191, 0.0
    %v348 = vmax.f32 %v192, 0.0
    %v349 = vmax.f32 %v193, 0.0
    %v350 = vmax.f32 %v194, 0.0
    %v351 = vmax.f32 %v195, 0.0
    %v352 = vmax.f32 %v196, 0.0
    %v353 = vmax.f32 %v197, 0.0
    %v354 = vmax.f32 %v198, 0.0
    %v355 = vmax.f32 %v199, 0.0
    %v356 = vmax.f32 %v200, 0.0
    %v357 = vmax.f32 %v201, 0.0
    %v358 = vmax.f32 %v202, 0.0
    %v359 = vmax.f32 %v203, 0.0
    %v360 = vmax.f32 %v204, 0.0
    %v361 = vmax.f32 %v205, 0.0
    %v362 = vmax.f32 %v206, 0.0
    %v363 = vmax.f32 %v207, 0.0
    %v364 = vmax.f32 %v208, 0.0
    %v365 = vmax.f32 %v209, 0.0
    %v366 = vmax.f32 %v210, 0.0
    %v367 = vmax.f32 %v211, 0.0
    %v368 = vmax.f32 %v212, 0.0
    %v369 = vmax.f32 %v213, 0.0
    %v370 = vmax.f32 %v214, 0.0
    %v371 = vmax.f32 %v215, 0.0
    %v372 = vmax.f32 %v216, 0.0
    %v373 = vmax.f32 %v217, 0.0
    %v374 = vmax.f32 %v218, 0.0
    %v375 = vmax.f32 %v219, 0.0
    %v376 = vmax.f32 %v220, 0.0
    %v377 = vmax.f32 %v221, 0.0
    %v378 = vmax.f32 %v222, 0.0
    %v379 = vmax.f32 %v223, 0.0
    %v380 = vmax.f32 %v224, 0.0
    %v381 = vmax.f32 %v225, 0.0
    %v382 = vmax.f32 %v226, 0.0
    %v383 = vmax.f32 %v227, 0.0
    %v384 = vmax.f32 %v228, 0.0
    %v385 = vmax.f32 %v229, 0.0
    %v386 = vmax.f32 %v230, 0.0
    %v387 = vmax.f32 %v231, 0.0
    %v388 = vmax.f32 %v232, 0.0
    %v389 = vmax.f32 %v233, 0.0
    %v390 = vmax.f32 %v234, 0.0
    %v391 = vmax.f32 %v235, 0.0
    %v392 = vmax.f32 %v236, 0.0
    %v393 = vmax.f32 %v237, 0.0
    %v394 = vmax.f32 %v238, 0.0
    %v395 = vmax.f32 %v239, 0.0
    %v396 = vmax.f32 %v240, 0.0
    %v397 = vmax.f32 %v241, 0.0
    %v398 = vmax.f32 %v242, 0.0
    %v399 = vmax.f32 %v243, 0.0
    %v400 = vmax.f32 %v244, 0.0
    %v401 = vmax.f32 %v245, 0.0
    %v402 = vmax.f32 %v246, 0.0
    %v403 = vmax.f32 %v247, 0.0
    %v404 = vmax.f32 %v248, 0.0
    %v405 = vmax.f32 %v249, 0.0
    %v406 = vmax.f32 %v250, 0.0
    %v407 = vmax.f32 %v251, 0.0
    %v408 = vmax.f32 %v252, 0.0
    %v409 = vpack.c.bf16 %v255, %v253
    %v410 = vpack.c.bf16 %v256, %v254
    %v411 = vpack.c.bf16 %v259, %v257
    %v412 = vpack.c.bf16 %v260, %v258
    %v413 = vpack.c.bf16 %v263, %v261
    %v414 = vpack.c.bf16 %v264, %v262
    %v415 = vpack.c.bf16 %v267, %v265
    %v416 = vpack.c.bf16 %v268, %v266
    %v417 = vpack.c.bf16 %v271, %v269
    %v418 = vpack.c.bf16 %v272, %v270
    %v419 = vpack.c.bf16 %v275, %v273
    %v420 = vpack.c.bf16 %v276, %v274
    %v421 = vpack.c.bf16 %v279, %v277
    %v422 = vpack.c.bf16 %v280, %v278
    %v423 = vpack.c.bf16 %v283, %v281
    %v424 = vpack.c.bf16 %v284, %v282
    %v425 = vpack.c.bf16 %v287, %v285
    %v426 = vpack.c.bf16 %v288, %v286
    %v427 = vpack.c.bf16 %v291, %v289
    %v428 = vpack.c.bf16 %v292, %v290
    %v429 = vpack.c.bf16 %v295, %v293
    %v430 = vpack.c.bf16 %v296, %v294
    %v431 = vpack.c.bf16 %v299, %v297
    %v432 = vpack.c.bf16 %v300, %v298
    %v433 = vpack.c.bf16 %v303, %v301
    %v434 = vpack.c.bf16 %v304, %v302
    %v435 = vpack.c.bf16 %v307, %v305
    %v436 = vpack.c.bf16 %v308, %v306
    %v437 = vpack.c.bf16 %v311, %v309
    %v438 = vpack.c.bf16 %v312, %v310
    %v439 = vpack.c.bf16 %v315, %v313
    %v440 = vpack.c.bf16 %v316, %v314
    %v441 = vpack.c.bf16 %v319, %v317
    %v442 = vpack.c.bf16 %v320, %v318
    %v443 = vpack.c.bf16 %v323, %v321
    %v444 = vpack.c.bf16 %v324, %v322
    %v445 = vpack.c.bf16 %v327, %v325
    %v446 = vpack.c.bf16 %v328, %v326
    %v447 = vpack.c.bf16 %v331, %v329
    %v448 = vpack.c.bf16 %v332, %v330
    %v449 = vpack.c.bf16 %v335, %v333
    %v450 = vpack.c.bf16 %v336, %v334
    %v451 = vpack.c.bf16 %v339, %v337
    %v452 = vpack.c.bf16 %v340, %v338
    %v453 = vpack.c.bf16 %v343, %v341
    %v454 = vpack.c.bf16 %v344, %v342
    %v455 = vpack.c.bf16 %v347, %v345
    %v456 = vpack.c.bf16 %v348, %v346
    %v457 = vpack.c.bf16 %v351, %v349
    %v458 = vpack.c.bf16 %v352, %v350
    %v459 = vpack.c.bf16 %v355, %v353
    %v460 = vpack.c.bf16 %v356, %v354
    %v461 = vpack.c.bf16 %v359, %v357
    %v462 = vpack.c.bf16 %v360, %v358
    %v463 = vpack.c.bf16 %v363, %v361
    %v464 = vpack.c.bf16 %v364, %v362
    %v465 = vpack.c.bf16 %v367, %v365
    %v466 = vpack.c.bf16 %v368, %v366
    %v467 = vpack.c.bf16 %v371, %v369
    %v468 = vpack.c.bf16 %v372, %v370
    %v469 = vpack.c.bf16 %v375, %v373
    %v470 = vpack.c.bf16 %v376, %v374
    %v471 = vpack.c.bf16 %v379, %v377
    %v472 = vpack.c.bf16 %v380, %v378
    %v473 = vpack.c.bf16 %v383, %v381
    %v474 = vpack.c.bf16 %v384, %v382
    %v475 = vpack.c.bf16 %v387, %v385
    %v476 = vpack.c.bf16 %v388, %v386
    %v477 = vpack.c.bf16 %v391, %v389
    %v478 = vpack.c.bf16 %v392, %v390
    %v479 = vpack.c.bf16 %v395, %v393
    %v480 = vpack.c.bf16 %v396, %v394
    %v481 = vpack.c.bf16 %v399, %v397
    %v482 = vpack.c.bf16 %v400, %v398
    %v483 = vpack.c.bf16 %v403, %v401
    %v484 = vpack.c.bf16 %v404, %v402
    %v485 = vpack.c.bf16 %v407, %v405
    %v486 = vpack.c.bf16 %v408, %v406
    %v487 = vld [vmem:[%s1] sm:$0xff]
    %v488 = vld [vmem:[%s1 + $0x8] sm:$0xff]
    %v489 = vld [vmem:[%s1 + $0x10] sm:$0xf]
    %v490 = vld [vmem:[%s1 + $0x14] sm:$0xff]
    %v491 = vld [vmem:[%s1 + $0x1c] sm:$0xff]
    %v492 = vld [vmem:[%s1 + $0x24] sm:$0xf]
    %v493 = vld [vmem:[%s1 + $0x28] sm:$0xff]
    %v494 = vld [vmem:[%s1 + $0x30] sm:$0xff]
    %v495 = vld [vmem:[%s1 + $0x38] sm:$0xf]
    %v496 = vld [vmem:[%s1 + $0x3c] sm:$0xff]
    %v497 = vld [vmem:[%s1 + $0x44] sm:$0xff]
    %v498 = vld [vmem:[%s1 + $0x4c] sm:$0xf]
    %v499 = vld [vmem:[%s1 + $0x50] sm:$0xff]
    %v500 = vld [vmem:[%s1 + $0x58] sm:$0xff]
    %v501 = vld [vmem:[%s1 + $0x60] sm:$0xf]
    %v502 = vld [vmem:[%s1 + $0x64] sm:$0xff]
    %v503 = vld [vmem:[%s1 + $0x6c] sm:$0xff]
    %v504 = vld [vmem:[%s1 + $0x74] sm:$0xf]
    %v505 = vld [vmem:[%s1 + $0x78] sm:$0xff]
    %v506 = vld [vmem:[%s1 + $0x80] sm:$0xff]
    %v507 = vld [vmem:[%s1 + $0x88] sm:$0xf]
    %v508 = vld [vmem:[%s1 + $0x8c] sm:$0xff]
    %v509 = vld [vmem:[%s1 + $0x94] sm:$0xff]
    %v510 = vld [vmem:[%s1 + $0x9c] sm:$0xf]
    %v511 = vld [vmem:[%s1 + $0xa0] sm:$0xff]
    %v512 = vld [vmem:[%s1 + $0xa8] sm:$0xff]
    %v513 = vld [vmem:[%s1 + $0xb0] sm:$0xf]
    %v514 = vld [vmem:[%s1 + $0xb4] sm:$0xff]
    %v515 = vld [vmem:[%s1 + $0xbc] sm:$0xff]
    %v516 = vld [vmem:[%s1 + $0xc4] sm:$0xf]
    %v517 = vld [vmem:[%s1 + $0xc8] sm:$0xff]
    %v518 = vld [vmem:[%s1 + $0xd0] sm:$0xff]
    %v519 = vld [vmem:[%s1 + $0xd8] sm:$0xf]
    %v520 = vld [vmem:[%s1 + $0xdc] sm:$0xff]
    %v521 = vld [vmem:[%s1 + $0xe4] sm:$0xff]
    %v522 = vld [vmem:[%s1 + $0xec] sm:$0xf]
    %v523 = vld [vmem:[%s1 + $0xf0] sm:$0xff]
    %v524 = vld [vmem:[%s1 + $0xf8] sm:$0xff]
    %v525 = vld [vmem:[%s1 + $0x100] sm:$0xf]
    %v526 = vld [vmem:[%s1 + $0x104] sm:$0xff]
    %v527 = vld [vmem:[%s1 + $0x10c] sm:$0xff]
    %v528 = vld [vmem:[%s1 + $0x114] sm:$0xf]
    %v529 = vld [vmem:[%s1 + $0x118] sm:$0xff]
    %v530 = vld [vmem:[%s1 + $0x120] sm:$0xff]
    %v531 = vld [vmem:[%s1 + $0x128] sm:$0xf]
    %v532 = vld [vmem:[%s1 + $0x12c] sm:$0xff]
    %v533 = vld [vmem:[%s1 + $0x134] sm:$0xff]
    %v534 = vld [vmem:[%s1 + $0x13c] sm:$0xf]
    %v535 = vld [vmem:[%s1 + $0x140] sm:$0xff]
    %v536 = vld [vmem:[%s1 + $0x148] sm:$0xff]
    %v537 = vld [vmem:[%s1 + $0x150] sm:$0xf]
    %v538 = vld [vmem:[%s1 + $0x154] sm:$0xff]
    %v539 = vld [vmem:[%s1 + $0x15c] sm:$0xff]
    %v540 = vld [vmem:[%s1 + $0x164] sm:$0xf]
    %v541 = vld [vmem:[%s1 + $0x168] sm:$0xff]
    %v542 = vld [vmem:[%s1 + $0x170] sm:$0xff]
    %v543 = vld [vmem:[%s1 + $0x178] sm:$0xf]
    %v544 = vld [vmem:[%s1 + $0x17c] sm:$0xff]
    %v545 = vld [vmem:[%s1 + $0x184] sm:$0xff]
    %v546 = vld [vmem:[%s1 + $0x18c] sm:$0xf]
    %v547 = vld [vmem:[%s1 + $0x190] sm:$0xff]
    %v548 = vld [vmem:[%s1 + $0x198] sm:$0xff]
    %v549 = vld [vmem:[%s1 + $0x1a0] sm:$0xf]
    %v550 = vld [vmem:[%s1 + $0x1a4] sm:$0xff]
    %v551 = vld [vmem:[%s1 + $0x1ac] sm:$0xff]
    %v552 = vld [vmem:[%s1 + $0x1b4] sm:$0xf]
    %v553 = vld [vmem:[%s1 + $0x1b8] sm:$0xff]
    %v554 = vld [vmem:[%s1 + $0x1c0] sm:$0xff]
    %v555 = vld [vmem:[%s1 + $0x1c8] sm:$0xf]
    %v556 = vld [vmem:[%s1 + $0x1cc] sm:$0xff]
    %v557 = vld [vmem:[%s1 + $0x1d4] sm:$0xff]
    %v558 = vld [vmem:[%s1 + $0x1dc] sm:$0xf]
    %v631 = vunpack.c.l.b16 %v487
    %v632 = vunpack.c.h.b16 %v487
    %v633 = vunpack.c.l.b16 %v488
    %v634 = vunpack.c.h.b16 %v488
    %v635 = vunpack.c.l.b16 %v489
    %v636 = vunpack.c.l.b16 %v490
    %v637 = vunpack.c.h.b16 %v490
    %v638 = vunpack.c.l.b16 %v491
    %v639 = vunpack.c.h.b16 %v491
    %v640 = vunpack.c.l.b16 %v492
    %v641 = vunpack.c.l.b16 %v493
    %v642 = vunpack.c.h.b16 %v493
    %v643 = vunpack.c.l.b16 %v494
    %v644 = vunpack.c.h.b16 %v494
    %v645 = vunpack.c.l.b16 %v495
    %v646 = vunpack.c.l.b16 %v496
    %v647 = vunpack.c.h.b16 %v496
    %v648 = vunpack.c.l.b16 %v497
    %v649 = vunpack.c.h.b16 %v497
    %v650 = vunpack.c.l.b16 %v498
    %v651 = vunpack.c.l.b16 %v499
    %v652 = vunpack.c.h.b16 %v499
    %v653 = vunpack.c.l.b16 %v500
    %v654 = vunpack.c.h.b16 %v500
    %v655 = vunpack.c.l.b16 %v501
    %v656 = vunpack.c.l.b16 %v502
    %v657 = vunpack.c.h.b16 %v502
    %v658 = vunpack.c.l.b16 %v503
    %v659 = vunpack.c.h.b16 %v503
    %v660 = vunpack.c.l.b16 %v504
    %v661 = vunpack.c.l.b16 %v505
    %v662 = vunpack.c.h.b16 %v505
    %v663 = vunpack.c.l.b16 %v506
    %v664 = vunpack.c.h.b16 %v506
    %v665 = vunpack.c.l.b16 %v507
    %v666 = vunpack.c.l.b16 %v508
    %v667 = vunpack.c.h.b16 %v508
    %v668 = vunpack.c.l.b16 %v509
    %v669 = vunpack.c.h.b16 %v509
    %v670 = vunpack.c.l.b16 %v510
    %v671 = vunpack.c.l.b16 %v511
    %v672 = vunpack.c.h.b16 %v511
    %v673 = vunpack.c.l.b16 %v512
    %v674 = vunpack.c.h.b16 %v512
    %v675 = vunpack.c.l.b16 %v513
    %v676 = vunpack.c.l.b16 %v514
    %v677 = vunpack.c.h.b16 %v514
    %v678 = vunpack.c.l.b16 %v515
    %v679 = vunpack.c.h.b16 %v515
    %v680 = vunpack.c.l.b16 %v516
    %v681 = vunpack.c.l.b16 %v517
    %v682 = vunpack.c.h.b16 %v517
    %v683 = vunpack.c.l.b16 %v518
    %v684 = vunpack.c.h.b16 %v518
    %v685 = vunpack.c.l.b16 %v519
    %v686 = vunpack.c.l.b16 %v520
    %v687 = vunpack.c.h.b16 %v520
    %v688 = vunpack.c.l.b16 %v521
    %v689 = vunpack.c.h.b16 %v521
    %v690 = vunpack.c.l.b16 %v522
    %v691 = vunpack.c.l.b16 %v523
    %v692 = vunpack.c.h.b16 %v523
    %v693 = vunpack.c.l.b16 %v524
    %v694 = vunpack.c.h.b16 %v524
    %v695 = vunpack.c.l.b16 %v525
    %v696 = vunpack.c.l.b16 %v526
    %v697 = vunpack.c.h.b16 %v526
    %v698 = vunpack.c.l.b16 %v527
    %v699 = vunpack.c.h.b16 %v527
    %v700 = vunpack.c.l.b16 %v528
    %v701 = vunpack.c.l.b16 %v529
    %v702 = vunpack.c.h.b16 %v529
    %v703 = vunpack.c.l.b16 %v530
    %v704 = vunpack.c.h.b16 %v530
    %v705 = vunpack.c.l.b16 %v531
    %v706 = vunpack.c.l.b16 %v532
    %v707 = vunpack.c.h.b16 %v532
    %v708 = vunpack.c.l.b16 %v533
    %v709 = vunpack.c.h.b16 %v533
    %v710 = vunpack.c.l.b16 %v534
    %v711 = vunpack.c.l.b16 %v535
    %v712 = vunpack.c.h.b16 %v535
    %v713 = vunpack.c.l.b16 %v536
    %v714 = vunpack.c.h.b16 %v536
    %v715 = vunpack.c.l.b16 %v537
    %v716 = vunpack.c.l.b16 %v538
    %v717 = vunpack.c.h.b16 %v538
    %v718 = vunpack.c.l.b16 %v539
    %v719 = vunpack.c.h.b16 %v539
    %v720 = vunpack.c.l.b16 %v540
    %v721 = vunpack.c.l.b16 %v541
    %v722 = vunpack.c.h.b16 %v541
    %v723 = vunpack.c.l.b16 %v542
    %v724 = vunpack.c.h.b16 %v542
    %v725 = vunpack.c.l.b16 %v543
    %v726 = vunpack.c.l.b16 %v544
    %v727 = vunpack.c.h.b16 %v544
    %v728 = vunpack.c.l.b16 %v545
    %v729 = vunpack.c.h.b16 %v545
    %v730 = vunpack.c.l.b16 %v546
    %v731 = vunpack.c.l.b16 %v547
    %v732 = vunpack.c.h.b16 %v547
    %v733 = vunpack.c.l.b16 %v548
    %v734 = vunpack.c.h.b16 %v548
    %v735 = vunpack.c.l.b16 %v549
    %v736 = vunpack.c.l.b16 %v550
    %v737 = vunpack.c.h.b16 %v550
    %v738 = vunpack.c.l.b16 %v551
    %v739 = vunpack.c.h.b16 %v551
    %v740 = vunpack.c.l.b16 %v552
    %v741 = vunpack.c.l.b16 %v553
    %v742 = vunpack.c.h.b16 %v553
    %v743 = vunpack.c.l.b16 %v554
    %v744 = vunpack.c.h.b16 %v554
    %v745 = vunpack.c.l.b16 %v555
    %v746 = vunpack.c.l.b16 %v556
    %v747 = vunpack.c.h.b16 %v556
    %v748 = vunpack.c.l.b16 %v557
    %v749 = vunpack.c.h.b16 %v557
    %v750 = vunpack.c.l.b16 %v558
    %v751 = vpack.c.b16 %v636, %v631
    %v752 = vpack.c.b16 %v637, %v632
    %v753 = vpack.c.b16 %v638, %v633
    %v754 = vpack.c.b16 %v639, %v634
    %v755 = vpack.c.b16 %v640, %v635
    %v756 = vpack.c.b16 %v646, %v641
    %v757 = vpack.c.b16 %v647, %v642
    %v758 = vpack.c.b16 %v648, %v643
    %v759 = vpack.c.b16 %v649, %v644
    %v760 = vpack.c.b16 %v650, %v645
    %v761 = vpack.c.b16 %v656, %v651
    %v762 = vpack.c.b16 %v657, %v652
    %v763 = vpack.c.b16 %v658, %v653
    %v764 = vpack.c.b16 %v659, %v654
    %v765 = vpack.c.b16 %v660, %v655
    %v766 = vpack.c.b16 %v666, %v661
    %v767 = vpack.c.b16 %v667, %v662
    %v768 = vpack.c.b16 %v668, %v663
    %v769 = vpack.c.b16 %v669, %v664
    %v770 = vpack.c.b16 %v670, %v665
    %v771 = vpack.c.b16 %v676, %v671
    %v772 = vpack.c.b16 %v677, %v672
    %v773 = vpack.c.b16 %v678, %v673
    %v774 = vpack.c.b16 %v679, %v674
    %v775 = vpack.c.b16 %v680, %v675
    %v776 = vpack.c.b16 %v686, %v681
    %v777 = vpack.c.b16 %v687, %v682
    %v778 = vpack.c.b16 %v688, %v683
    %v779 = vpack.c.b16 %v689, %v684
    %v780 = vpack.c.b16 %v690, %v685
    %v781 = vpack.c.b16 %v696, %v691
    %v782 = vpack.c.b16 %v697, %v692
    %v783 = vpack.c.b16 %v698, %v693
    %v784 = vpack.c.b16 %v699, %v694
    %v785 = vpack.c.b16 %v700, %v695
    %v786 = vpack.c.b16 %v706, %v701
    %v787 = vpack.c.b16 %v707, %v702
    %v788 = vpack.c.b16 %v708, %v703
    %v789 = vpack.c.b16 %v709, %v704
    %v790 = vpack.c.b16 %v710, %v705
    %v791 = vpack.c.b16 %v716, %v711
    %v792 = vpack.c.b16 %v717, %v712
    %v793 = vpack.c.b16 %v718, %v713
    %v794 = vpack.c.b16 %v719, %v714
    %v795 = vpack.c.b16 %v720, %v715
    %v796 = vpack.c.b16 %v726, %v721
    %v797 = vpack.c.b16 %v727, %v722
    %v798 = vpack.c.b16 %v728, %v723
    %v799 = vpack.c.b16 %v729, %v724
    %v800 = vpack.c.b16 %v730, %v725
    %v801 = vpack.c.b16 %v736, %v731
    %v802 = vpack.c.b16 %v737, %v732
    %v803 = vpack.c.b16 %v738, %v733
    %v804 = vpack.c.b16 %v739, %v734
    %v805 = vpack.c.b16 %v740, %v735
    %v806 = vpack.c.b16 %v746, %v741
    %v807 = vpack.c.b16 %v747, %v742
    %v808 = vpack.c.b16 %v748, %v743
    %v809 = vpack.c.b16 %v749, %v744
    %v810 = vpack.c.b16 %v750, %v745
    %vm859 = vcmask 916480
    %v861 = vsel %vm859, %v755, 0
    %v864 = vsel %vm859, %v760, 0
    %v867 = vsel %vm859, %v765, 0
    %v870 = vsel %vm859, %v770, 0
    %v873 = vsel %vm859, %v775, 0
    %v876 = vsel %vm859, %v780, 0
    %v879 = vsel %vm859, %v785, 0
    %v882 = vsel %vm859, %v790, 0
    %v885 = vsel %vm859, %v795, 0
    %v888 = vsel %vm859, %v800, 0
    %v891 = vsel %vm859, %v805, 0
    %v894 = vsel %vm859, %v810, 0
    %896 = vmatpush.bf16.msra.mxu0 %v423
    %897 = vmatpush.bf16.msra.mxu0 %v421
    %898 = vmatpush.bf16.msra.mxu0 %v419
    %899 = vmatpush.bf16.msra.mxu0 %v417
    %900 = vmatpush.bf16.msra.mxu0 %v415
    %901 = vmatpush.bf16.msra.mxu0 %v413
    %902 = vmatpush.bf16.msra.mxu0 %v411
    %903 = vmatpush.bf16.msra.mxu0 %v409
    %904 = vmatmul.bf16.gmra.mxu0 %v751
    %v905 = vpop.f32.mrf.mxu0
    %v906 = vadd.f32 0.0, %v905
    %v907 = vpop.f32.mrf.mxu0
    %v908 = vadd.f32 0.0, %v907
    %909 = vmatmul.bf16.gmra.mxu0 %v756
    %v910 = vpop.f32.mrf.mxu0
    %v911 = vadd.f32 0.0, %v910
    %v912 = vpop.f32.mrf.mxu0
    %v913 = vadd.f32 0.0, %v912
    %914 = vmatmul.bf16.gmra.mxu0 %v761
    %v915 = vpop.f32.mrf.mxu0
    %v916 = vadd.f32 0.0, %v915
    %v917 = vpop.f32.mrf.mxu0
    %v918 = vadd.f32 0.0, %v917
    %919 = vmatmul.bf16.gmra.mxu0 %v766
    %v920 = vpop.f32.mrf.mxu0
    %v921 = vadd.f32 0.0, %v920
    %v922 = vpop.f32.mrf.mxu0
    %v923 = vadd.f32 0.0, %v922
    %924 = vmatmul.bf16.gmra.mxu0 %v771
    %v925 = vpop.f32.mrf.mxu0
    %v926 = vadd.f32 0.0, %v925
    %v927 = vpop.f32.mrf.mxu0
    %v928 = vadd.f32 0.0, %v927
    %929 = vmatmul.bf16.gmra.mxu0 %v776
    %v930 = vpop.f32.mrf.mxu0
    %v931 = vadd.f32 0.0, %v930
    %v932 = vpop.f32.mrf.mxu0
    %v933 = vadd.f32 0.0, %v932
    %934 = vmatmul.bf16.gmra.mxu0 %v781
    %v935 = vpop.f32.mrf.mxu0
    %v936 = vadd.f32 0.0, %v935
    %v937 = vpop.f32.mrf.mxu0
    %v938 = vadd.f32 0.0, %v937
    %939 = vmatmul.bf16.gmra.mxu0 %v786
    %v940 = vpop.f32.mrf.mxu0
    %v941 = vadd.f32 0.0, %v940
    %v942 = vpop.f32.mrf.mxu0
    %v943 = vadd.f32 0.0, %v942
    %944 = vmatmul.bf16.gmra.mxu0 %v791
    %v945 = vpop.f32.mrf.mxu0
    %v946 = vadd.f32 0.0, %v945
    %v947 = vpop.f32.mrf.mxu0
    %v948 = vadd.f32 0.0, %v947
    %949 = vmatmul.bf16.gmra.mxu0 %v796
    %v950 = vpop.f32.mrf.mxu0
    %v951 = vadd.f32 0.0, %v950
    %v952 = vpop.f32.mrf.mxu0
    %v953 = vadd.f32 0.0, %v952
    %954 = vmatmul.bf16.gmra.mxu0 %v801
    %v955 = vpop.f32.mrf.mxu0
    %v956 = vadd.f32 0.0, %v955
    %v957 = vpop.f32.mrf.mxu0
    %v958 = vadd.f32 0.0, %v957
    %959 = vmatmul.bf16.gmra.mxu0 %v806
    %v960 = vpop.f32.mrf.mxu0
    %v961 = vadd.f32 0.0, %v960
    %v962 = vpop.f32.mrf.mxu0
    %v963 = vadd.f32 0.0, %v962
    %964 = vdwg.mxu0
    %965 = vmatpush.bf16.msra.mxu0 %v439
    %966 = vmatpush.bf16.msra.mxu0 %v437
    %967 = vmatpush.bf16.msra.mxu0 %v435
    %968 = vmatpush.bf16.msra.mxu0 %v433
    %969 = vmatpush.bf16.msra.mxu0 %v431
    %970 = vmatpush.bf16.msra.mxu0 %v429
    %971 = vmatpush.bf16.msra.mxu0 %v427
    %972 = vmatpush.bf16.msra.mxu0 %v425
    %973 = vmatmul.bf16.gmra.mxu0 %v752
    %v974 = vpop.f32.mrf.mxu0
    %v975 = vadd.f32 %v906, %v974
    %v976 = vpop.f32.mrf.mxu0
    %v977 = vadd.f32 %v908, %v976
    %978 = vmatmul.bf16.gmra.mxu0 %v757
    %v979 = vpop.f32.mrf.mxu0
    %v980 = vadd.f32 %v911, %v979
    %v981 = vpop.f32.mrf.mxu0
    %v982 = vadd.f32 %v913, %v981
    %983 = vmatmul.bf16.gmra.mxu0 %v762
    %v984 = vpop.f32.mrf.mxu0
    %v985 = vadd.f32 %v916, %v984
    %v986 = vpop.f32.mrf.mxu0
    %v987 = vadd.f32 %v918, %v986
    %988 = vmatmul.bf16.gmra.mxu0 %v767
    %v989 = vpop.f32.mrf.mxu0
    %v990 = vadd.f32 %v921, %v989
    %v991 = vpop.f32.mrf.mxu0
    %v992 = vadd.f32 %v923, %v991
    %993 = vmatmul.bf16.gmra.mxu0 %v772
    %v994 = vpop.f32.mrf.mxu0
    %v995 = vadd.f32 %v926, %v994
    %v996 = vpop.f32.mrf.mxu0
    %v997 = vadd.f32 %v928, %v996
    %998 = vmatmul.bf16.gmra.mxu0 %v777
    %v999 = vpop.f32.mrf.mxu0
    %v1000 = vadd.f32 %v931, %v999
    %v1001 = vpop.f32.mrf.mxu0
    %v1002 = vadd.f32 %v933, %v1001
    %1003 = vmatmul.bf16.gmra.mxu0 %v782
    %v1004 = vpop.f32.mrf.mxu0
    %v1005 = vadd.f32 %v936, %v1004
    %v1006 = vpop.f32.mrf.mxu0
    %v1007 = vadd.f32 %v938, %v1006
    %1008 = vmatmul.bf16.gmra.mxu0 %v787
    %v1009 = vpop.f32.mrf.mxu0
    %v1010 = vadd.f32 %v941, %v1009
    %v1011 = vpop.f32.mrf.mxu0
    %v1012 = vadd.f32 %v943, %v1011
    %1013 = vmatmul.bf16.gmra.mxu0 %v792
    %v1014 = vpop.f32.mrf.mxu0
    %v1015 = vadd.f32 %v946, %v1014
    %v1016 = vpop.f32.mrf.mxu0
    %v1017 = vadd.f32 %v948, %v1016
    %1018 = vmatmul.bf16.gmra.mxu0 %v797
    %v1019 = vpop.f32.mrf.mxu0
    %v1020 = vadd.f32 %v951, %v1019
    %v1021 = vpop.f32.mrf.mxu0
    %v1022 = vadd.f32 %v953, %v1021
    %1023 = vmatmul.bf16.gmra.mxu0 %v802
    %v1024 = vpop.f32.mrf.mxu0
    %v1025 = vadd.f32 %v956, %v1024
    %v1026 = vpop.f32.mrf.mxu0
    %v1027 = vadd.f32 %v958, %v1026
    %1028 = vmatmul.bf16.gmra.mxu0 %v807
    %v1029 = vpop.f32.mrf.mxu0
    %v1030 = vadd.f32 %v961, %v1029
    %v1031 = vpop.f32.mrf.mxu0
    %v1032 = vadd.f32 %v963, %v1031
    %1033 = vdwg.mxu0
    %1034 = vmatpush.bf16.msra.mxu0 %v455
    %1035 = vmatpush.bf16.msra.mxu0 %v453
    %1036 = vmatpush.bf16.msra.mxu0 %v451
    %1037 = vmatpush.bf16.msra.mxu0 %v449
    %1038 = vmatpush.bf16.msra.mxu0 %v447
    %1039 = vmatpush.bf16.msra.mxu0 %v445
    %1040 = vmatpush.bf16.msra.mxu0 %v443
    %1041 = vmatpush.bf16.msra.mxu0 %v441
    %1042 = vmatmul.bf16.gmra.mxu0 %v753
    %v1043 = vpop.f32.mrf.mxu0
    %v1044 = vadd.f32 %v975, %v1043
    %v1045 = vpop.f32.mrf.mxu0
    %v1046 = vadd.f32 %v977, %v1045
    %1047 = vmatmul.bf16.gmra.mxu0 %v758
    %v1048 = vpop.f32.mrf.mxu0
    %v1049 = vadd.f32 %v980, %v1048
    %v1050 = vpop.f32.mrf.mxu0
    %v1051 = vadd.f32 %v982, %v1050
    %1052 = vmatmul.bf16.gmra.mxu0 %v763
    %v1053 = vpop.f32.mrf.mxu0
    %v1054 = vadd.f32 %v985, %v1053
    %v1055 = vpop.f32.mrf.mxu0
    %v1056 = vadd.f32 %v987, %v1055
    %1057 = vmatmul.bf16.gmra.mxu0 %v768
    %v1058 = vpop.f32.mrf.mxu0
    %v1059 = vadd.f32 %v990, %v1058
    %v1060 = vpop.f32.mrf.mxu0
    %v1061 = vadd.f32 %v992, %v1060
    %1062 = vmatmul.bf16.gmra.mxu0 %v773
    %v1063 = vpop.f32.mrf.mxu0
    %v1064 = vadd.f32 %v995, %v1063
    %v1065 = vpop.f32.mrf.mxu0
    %v1066 = vadd.f32 %v997, %v1065
    %1067 = vmatmul.bf16.gmra.mxu0 %v778
    %v1068 = vpop.f32.mrf.mxu0
    %v1069 = vadd.f32 %v1000, %v1068
    %v1070 = vpop.f32.mrf.mxu0
    %v1071 = vadd.f32 %v1002, %v1070
    %1072 = vmatmul.bf16.gmra.mxu0 %v783
    %v1073 = vpop.f32.mrf.mxu0
    %v1074 = vadd.f32 %v1005, %v1073
    %v1075 = vpop.f32.mrf.mxu0
    %v1076 = vadd.f32 %v1007, %v1075
    %1077 = vmatmul.bf16.gmra.mxu0 %v788
    %v1078 = vpop.f32.mrf.mxu0
    %v1079 = vadd.f32 %v1010, %v1078
    %v1080 = vpop.f32.mrf.mxu0
    %v1081 = vadd.f32 %v1012, %v1080
    %1082 = vmatmul.bf16.gmra.mxu0 %v793
    %v1083 = vpop.f32.mrf.mxu0
    %v1084 = vadd.f32 %v1015, %v1083
    %v1085 = vpop.f32.mrf.mxu0
    %v1086 = vadd.f32 %v1017, %v1085
    %1087 = vmatmul.bf16.gmra.mxu0 %v798
    %v1088 = vpop.f32.mrf.mxu0
    %v1089 = vadd.f32 %v1020, %v1088
    %v1090 = vpop.f32.mrf.mxu0
    %v1091 = vadd.f32 %v1022, %v1090
    %1092 = vmatmul.bf16.gmra.mxu0 %v803
    %v1093 = vpop.f32.mrf.mxu0
    %v1094 = vadd.f32 %v1025, %v1093
    %v1095 = vpop.f32.mrf.mxu0
    %v1096 = vadd.f32 %v1027, %v1095
    %1097 = vmatmul.bf16.gmra.mxu0 %v808
    %v1098 = vpop.f32.mrf.mxu0
    %v1099 = vadd.f32 %v1030, %v1098
    %v1100 = vpop.f32.mrf.mxu0
    %v1101 = vadd.f32 %v1032, %v1100
    %1102 = vdwg.mxu0
    %1103 = vmatpush.bf16.msra.mxu0 %v471
    %1104 = vmatpush.bf16.msra.mxu0 %v469
    %1105 = vmatpush.bf16.msra.mxu0 %v467
    %1106 = vmatpush.bf16.msra.mxu0 %v465
    %1107 = vmatpush.bf16.msra.mxu0 %v463
    %1108 = vmatpush.bf16.msra.mxu0 %v461
    %1109 = vmatpush.bf16.msra.mxu0 %v459
    %1110 = vmatpush.bf16.msra.mxu0 %v457
    %1111 = vmatmul.bf16.gmra.mxu0 %v754
    %v1112 = vpop.f32.mrf.mxu0
    %v1113 = vadd.f32 %v1044, %v1112
    %v1114 = vpop.f32.mrf.mxu0
    %v1115 = vadd.f32 %v1046, %v1114
    %1116 = vmatmul.bf16.gmra.mxu0 %v759
    %v1117 = vpop.f32.mrf.mxu0
    %v1118 = vadd.f32 %v1049, %v1117
    %v1119 = vpop.f32.mrf.mxu0
    %v1120 = vadd.f32 %v1051, %v1119
    %1121 = vmatmul.bf16.gmra.mxu0 %v764
    %v1122 = vpop.f32.mrf.mxu0
    %v1123 = vadd.f32 %v1054, %v1122
    %v1124 = vpop.f32.mrf.mxu0
    %v1125 = vadd.f32 %v1056, %v1124
    %1126 = vmatmul.bf16.gmra.mxu0 %v769
    %v1127 = vpop.f32.mrf.mxu0
    %v1128 = vadd.f32 %v1059, %v1127
    %v1129 = vpop.f32.mrf.mxu0
    %v1130 = vadd.f32 %v1061, %v1129
    %1131 = vmatmul.bf16.gmra.mxu0 %v774
    %v1132 = vpop.f32.mrf.mxu0
    %v1133 = vadd.f32 %v1064, %v1132
    %v1134 = vpop.f32.mrf.mxu0
    %v1135 = vadd.f32 %v1066, %v1134
    %1136 = vmatmul.bf16.gmra.mxu0 %v779
    %v1137 = vpop.f32.mrf.mxu0
    %v1138 = vadd.f32 %v1069, %v1137
    %v1139 = vpop.f32.mrf.mxu0
    %v1140 = vadd.f32 %v1071, %v1139
    %1141 = vmatmul.bf16.gmra.mxu0 %v784
    %v1142 = vpop.f32.mrf.mxu0
    %v1143 = vadd.f32 %v1074, %v1142
    %v1144 = vpop.f32.mrf.mxu0
    %v1145 = vadd.f32 %v1076, %v1144
    %1146 = vmatmul.bf16.gmra.mxu0 %v789
    %v1147 = vpop.f32.mrf.mxu0
    %v1148 = vadd.f32 %v1079, %v1147
    %v1149 = vpop.f32.mrf.mxu0
    %v1150 = vadd.f32 %v1081, %v1149
    %1151 = vmatmul.bf16.gmra.mxu0 %v794
    %v1152 = vpop.f32.mrf.mxu0
    %v1153 = vadd.f32 %v1084, %v1152
    %v1154 = vpop.f32.mrf.mxu0
    %v1155 = vadd.f32 %v1086, %v1154
    %1156 = vmatmul.bf16.gmra.mxu0 %v799
    %v1157 = vpop.f32.mrf.mxu0
    %v1158 = vadd.f32 %v1089, %v1157
    %v1159 = vpop.f32.mrf.mxu0
    %v1160 = vadd.f32 %v1091, %v1159
    %1161 = vmatmul.bf16.gmra.mxu0 %v804
    %v1162 = vpop.f32.mrf.mxu0
    %v1163 = vadd.f32 %v1094, %v1162
    %v1164 = vpop.f32.mrf.mxu0
    %v1165 = vadd.f32 %v1096, %v1164
    %1166 = vmatmul.bf16.gmra.mxu0 %v809
    %v1167 = vpop.f32.mrf.mxu0
    %v1168 = vadd.f32 %v1099, %v1167
    %v1169 = vpop.f32.mrf.mxu0
    %v1170 = vadd.f32 %v1101, %v1169
    %1171 = vdwg.mxu0
    %1172 = vmatpush.bf16.msra.mxu0 0
    %1173 = vmatpush.bf16.msra.mxu0 %v485
    %1174 = vmatpush.bf16.msra.mxu0 %v483
    %1175 = vmatpush.bf16.msra.mxu0 %v481
    %1176 = vmatpush.bf16.msra.mxu0 %v479
    %1177 = vmatpush.bf16.msra.mxu0 %v477
    %1178 = vmatpush.bf16.msra.mxu0 %v475
    %1179 = vmatpush.bf16.msra.mxu0 %v473
    %1180 = vmatmul.bf16.gmra.mxu0 %v861
    %v1181 = vpop.f32.mrf.mxu0
    %v1182 = vadd.f32 %v1113, %v1181
    %v1183 = vpop.f32.mrf.mxu0
    %v1184 = vadd.f32 %v1115, %v1183
    %1185 = vmatmul.bf16.gmra.mxu0 %v864
    %v1186 = vpop.f32.mrf.mxu0
    %v1187 = vadd.f32 %v1118, %v1186
    %v1188 = vpop.f32.mrf.mxu0
    %v1189 = vadd.f32 %v1120, %v1188
    %1190 = vmatmul.bf16.gmra.mxu0 %v867
    %v1191 = vpop.f32.mrf.mxu0
    %v1192 = vadd.f32 %v1123, %v1191
    %v1193 = vpop.f32.mrf.mxu0
    %v1194 = vadd.f32 %v1125, %v1193
    %1195 = vmatmul.bf16.gmra.mxu0 %v870
    %v1196 = vpop.f32.mrf.mxu0
    %v1197 = vadd.f32 %v1128, %v1196
    %v1198 = vpop.f32.mrf.mxu0
    %v1199 = vadd.f32 %v1130, %v1198
    %1200 = vmatmul.bf16.gmra.mxu0 %v873
    %v1201 = vpop.f32.mrf.mxu0
    %v1202 = vadd.f32 %v1133, %v1201
    %v1203 = vpop.f32.mrf.mxu0
    %v1204 = vadd.f32 %v1135, %v1203
    %1205 = vmatmul.bf16.gmra.mxu0 %v876
    %v1206 = vpop.f32.mrf.mxu0
    %v1207 = vadd.f32 %v1138, %v1206
    %v1208 = vpop.f32.mrf.mxu0
    %v1209 = vadd.f32 %v1140, %v1208
    %1210 = vmatmul.bf16.gmra.mxu0 %v879
    %v1211 = vpop.f32.mrf.mxu0
    %v1212 = vadd.f32 %v1143, %v1211
    %v1213 = vpop.f32.mrf.mxu0
    %v1214 = vadd.f32 %v1145, %v1213
    %1215 = vmatmul.bf16.gmra.mxu0 %v882
    %v1216 = vpop.f32.mrf.mxu0
    %v1217 = vadd.f32 %v1148, %v1216
    %v1218 = vpop.f32.mrf.mxu0
    %v1219 = vadd.f32 %v1150, %v1218
    %1220 = vmatmul.bf16.gmra.mxu0 %v885
    %v1221 = vpop.f32.mrf.mxu0
    %v1222 = vadd.f32 %v1153, %v1221
    %v1223 = vpop.f32.mrf.mxu0
    %v1224 = vadd.f32 %v1155, %v1223
    %1225 = vmatmul.bf16.gmra.mxu0 %v888
    %v1226 = vpop.f32.mrf.mxu0
    %v1227 = vadd.f32 %v1158, %v1226
    %v1228 = vpop.f32.mrf.mxu0
    %v1229 = vadd.f32 %v1160, %v1228
    %1230 = vmatmul.bf16.gmra.mxu0 %v891
    %v1231 = vpop.f32.mrf.mxu0
    %v1232 = vadd.f32 %v1163, %v1231
    %v1233 = vpop.f32.mrf.mxu0
    %v1234 = vadd.f32 %v1165, %v1233
    %1235 = vmatmul.bf16.gmra.mxu0 %v894
    %v1236 = vpop.f32.mrf.mxu0
    %v1237 = vadd.f32 %v1168, %v1236
    %v1238 = vpop.f32.mrf.mxu0
    %v1239 = vadd.f32 %v1170, %v1238
    %1240 = vdwg.mxu0
    %1241 = vmatpush.bf16.msra.mxu0 %v424
    %1242 = vmatpush.bf16.msra.mxu0 %v422
    %1243 = vmatpush.bf16.msra.mxu0 %v420
    %1244 = vmatpush.bf16.msra.mxu0 %v418
    %1245 = vmatpush.bf16.msra.mxu0 %v416
    %1246 = vmatpush.bf16.msra.mxu0 %v414
    %1247 = vmatpush.bf16.msra.mxu0 %v412
    %1248 = vmatpush.bf16.msra.mxu0 %v410
    %1249 = vmatmul.bf16.gmra.mxu0 %v751
    %v1250 = vpop.f32.mrf.mxu0
    %v1251 = vadd.f32 0.0, %v1250
    %v1252 = vpop.f32.mrf.mxu0
    %v1253 = vadd.f32 0.0, %v1252
    %1254 = vmatmul.bf16.gmra.mxu0 %v756
    %v1255 = vpop.f32.mrf.mxu0
    %v1256 = vadd.f32 0.0, %v1255
    %v1257 = vpop.f32.mrf.mxu0
    %v1258 = vadd.f32 0.0, %v1257
    %1259 = vmatmul.bf16.gmra.mxu0 %v761
    %v1260 = vpop.f32.mrf.mxu0
    %v1261 = vadd.f32 0.0, %v1260
    %v1262 = vpop.f32.mrf.mxu0
    %v1263 = vadd.f32 0.0, %v1262
    %1264 = vmatmul.bf16.gmra.mxu0 %v766
    %v1265 = vpop.f32.mrf.mxu0
    %v1266 = vadd.f32 0.0, %v1265
    %v1267 = vpop.f32.mrf.mxu0
    %v1268 = vadd.f32 0.0, %v1267
    %1269 = vmatmul.bf16.gmra.mxu0 %v771
    %v1270 = vpop.f32.mrf.mxu0
    %v1271 = vadd.f32 0.0, %v1270
    %v1272 = vpop.f32.mrf.mxu0
    %v1273 = vadd.f32 0.0, %v1272
    %1274 = vmatmul.bf16.gmra.mxu0 %v776
    %v1275 = vpop.f32.mrf.mxu0
    %v1276 = vadd.f32 0.0, %v1275
    %v1277 = vpop.f32.mrf.mxu0
    %v1278 = vadd.f32 0.0, %v1277
    %1279 = vmatmul.bf16.gmra.mxu0 %v781
    %v1280 = vpop.f32.mrf.mxu0
    %v1281 = vadd.f32 0.0, %v1280
    %v1282 = vpop.f32.mrf.mxu0
    %v1283 = vadd.f32 0.0, %v1282
    %1284 = vmatmul.bf16.gmra.mxu0 %v786
    %v1285 = vpop.f32.mrf.mxu0
    %v1286 = vadd.f32 0.0, %v1285
    %v1287 = vpop.f32.mrf.mxu0
    %v1288 = vadd.f32 0.0, %v1287
    %1289 = vmatmul.bf16.gmra.mxu0 %v791
    %v1290 = vpop.f32.mrf.mxu0
    %v1291 = vadd.f32 0.0, %v1290
    %v1292 = vpop.f32.mrf.mxu0
    %v1293 = vadd.f32 0.0, %v1292
    %1294 = vmatmul.bf16.gmra.mxu0 %v796
    %v1295 = vpop.f32.mrf.mxu0
    %v1296 = vadd.f32 0.0, %v1295
    %v1297 = vpop.f32.mrf.mxu0
    %v1298 = vadd.f32 0.0, %v1297
    %1299 = vmatmul.bf16.gmra.mxu0 %v801
    %v1300 = vpop.f32.mrf.mxu0
    %v1301 = vadd.f32 0.0, %v1300
    %v1302 = vpop.f32.mrf.mxu0
    %v1303 = vadd.f32 0.0, %v1302
    %1304 = vmatmul.bf16.gmra.mxu0 %v806
    %v1305 = vpop.f32.mrf.mxu0
    %v1306 = vadd.f32 0.0, %v1305
    %v1307 = vpop.f32.mrf.mxu0
    %v1308 = vadd.f32 0.0, %v1307
    %1309 = vdwg.mxu0
    %1310 = vmatpush.bf16.msra.mxu0 %v440
    %1311 = vmatpush.bf16.msra.mxu0 %v438
    %1312 = vmatpush.bf16.msra.mxu0 %v436
    %1313 = vmatpush.bf16.msra.mxu0 %v434
    %1314 = vmatpush.bf16.msra.mxu0 %v432
    %1315 = vmatpush.bf16.msra.mxu0 %v430
    %1316 = vmatpush.bf16.msra.mxu0 %v428
    %1317 = vmatpush.bf16.msra.mxu0 %v426
    %1318 = vmatmul.bf16.gmra.mxu0 %v752
    %v1319 = vpop.f32.mrf.mxu0
    %v1320 = vadd.f32 %v1251, %v1319
    %v1321 = vpop.f32.mrf.mxu0
    %v1322 = vadd.f32 %v1253, %v1321
    %1323 = vmatmul.bf16.gmra.mxu0 %v757
    %v1324 = vpop.f32.mrf.mxu0
    %v1325 = vadd.f32 %v1256, %v1324
    %v1326 = vpop.f32.mrf.mxu0
    %v1327 = vadd.f32 %v1258, %v1326
    %1328 = vmatmul.bf16.gmra.mxu0 %v762
    %v1329 = vpop.f32.mrf.mxu0
    %v1330 = vadd.f32 %v1261, %v1329
    %v1331 = vpop.f32.mrf.mxu0
    %v1332 = vadd.f32 %v1263, %v1331
    %1333 = vmatmul.bf16.gmra.mxu0 %v767
    %v1334 = vpop.f32.mrf.mxu0
    %v1335 = vadd.f32 %v1266, %v1334
    %v1336 = vpop.f32.mrf.mxu0
    %v1337 = vadd.f32 %v1268, %v1336
    %1338 = vmatmul.bf16.gmra.mxu0 %v772
    %v1339 = vpop.f32.mrf.mxu0
    %v1340 = vadd.f32 %v1271, %v1339
    %v1341 = vpop.f32.mrf.mxu0
    %v1342 = vadd.f32 %v1273, %v1341
    %1343 = vmatmul.bf16.gmra.mxu0 %v777
    %v1344 = vpop.f32.mrf.mxu0
    %v1345 = vadd.f32 %v1276, %v1344
    %v1346 = vpop.f32.mrf.mxu0
    %v1347 = vadd.f32 %v1278, %v1346
    %1348 = vmatmul.bf16.gmra.mxu0 %v782
    %v1349 = vpop.f32.mrf.mxu0
    %v1350 = vadd.f32 %v1281, %v1349
    %v1351 = vpop.f32.mrf.mxu0
    %v1352 = vadd.f32 %v1283, %v1351
    %1353 = vmatmul.bf16.gmra.mxu0 %v787
    %v1354 = vpop.f32.mrf.mxu0
    %v1355 = vadd.f32 %v1286, %v1354
    %v1356 = vpop.f32.mrf.mxu0
    %v1357 = vadd.f32 %v1288, %v1356
    %1358 = vmatmul.bf16.gmra.mxu0 %v792
    %v1359 = vpop.f32.mrf.mxu0
    %v1360 = vadd.f32 %v1291, %v1359
    %v1361 = vpop.f32.mrf.mxu0
    %v1362 = vadd.f32 %v1293, %v1361
    %1363 = vmatmul.bf16.gmra.mxu0 %v797
    %v1364 = vpop.f32.mrf.mxu0
    %v1365 = vadd.f32 %v1296, %v1364
    %v1366 = vpop.f32.mrf.mxu0
    %v1367 = vadd.f32 %v1298, %v1366
    %1368 = vmatmul.bf16.gmra.mxu0 %v802
    %v1369 = vpop.f32.mrf.mxu0
    %v1370 = vadd.f32 %v1301, %v1369
    %v1371 = vpop.f32.mrf.mxu0
    %v1372 = vadd.f32 %v1303, %v1371
    %1373 = vmatmul.bf16.gmra.mxu0 %v807
    %v1374 = vpop.f32.mrf.mxu0
    %v1375 = vadd.f32 %v1306, %v1374
    %v1376 = vpop.f32.mrf.mxu0
    %v1377 = vadd.f32 %v1308, %v1376
    %1378 = vdwg.mxu0
    %1379 = vmatpush.bf16.msra.mxu0 %v456
    %1380 = vmatpush.bf16.msra.mxu0 %v454
    %1381 = vmatpush.bf16.msra.mxu0 %v452
    %1382 = vmatpush.bf16.msra.mxu0 %v450
    %1383 = vmatpush.bf16.msra.mxu0 %v448
    %1384 = vmatpush.bf16.msra.mxu0 %v446
    %1385 = vmatpush.bf16.msra.mxu0 %v444
    %1386 = vmatpush.bf16.msra.mxu0 %v442
    %1387 = vmatmul.bf16.gmra.mxu0 %v753
    %v1388 = vpop.f32.mrf.mxu0
    %v1389 = vadd.f32 %v1320, %v1388
    %v1390 = vpop.f32.mrf.mxu0
    %v1391 = vadd.f32 %v1322, %v1390
    %1392 = vmatmul.bf16.gmra.mxu0 %v758
    %v1393 = vpop.f32.mrf.mxu0
    %v1394 = vadd.f32 %v1325, %v1393
    %v1395 = vpop.f32.mrf.mxu0
    %v1396 = vadd.f32 %v1327, %v1395
    %1397 = vmatmul.bf16.gmra.mxu0 %v763
    %v1398 = vpop.f32.mrf.mxu0
    %v1399 = vadd.f32 %v1330, %v1398
    %v1400 = vpop.f32.mrf.mxu0
    %v1401 = vadd.f32 %v1332, %v1400
    %1402 = vmatmul.bf16.gmra.mxu0 %v768
    %v1403 = vpop.f32.mrf.mxu0
    %v1404 = vadd.f32 %v1335, %v1403
    %v1405 = vpop.f32.mrf.mxu0
    %v1406 = vadd.f32 %v1337, %v1405
    %1407 = vmatmul.bf16.gmra.mxu0 %v773
    %v1408 = vpop.f32.mrf.mxu0
    %v1409 = vadd.f32 %v1340, %v1408
    %v1410 = vpop.f32.mrf.mxu0
    %v1411 = vadd.f32 %v1342, %v1410
    %1412 = vmatmul.bf16.gmra.mxu0 %v778
    %v1413 = vpop.f32.mrf.mxu0
    %v1414 = vadd.f32 %v1345, %v1413
    %v1415 = vpop.f32.mrf.mxu0
    %v1416 = vadd.f32 %v1347, %v1415
    %1417 = vmatmul.bf16.gmra.mxu0 %v783
    %v1418 = vpop.f32.mrf.mxu0
    %v1419 = vadd.f32 %v1350, %v1418
    %v1420 = vpop.f32.mrf.mxu0
    %v1421 = vadd.f32 %v1352, %v1420
    %1422 = vmatmul.bf16.gmra.mxu0 %v788
    %v1423 = vpop.f32.mrf.mxu0
    %v1424 = vadd.f32 %v1355, %v1423
    %v1425 = vpop.f32.mrf.mxu0
    %v1426 = vadd.f32 %v1357, %v1425
    %1427 = vmatmul.bf16.gmra.mxu0 %v793
    %v1428 = vpop.f32.mrf.mxu0
    %v1429 = vadd.f32 %v1360, %v1428
    %v1430 = vpop.f32.mrf.mxu0
    %v1431 = vadd.f32 %v1362, %v1430
    %1432 = vmatmul.bf16.gmra.mxu0 %v798
    %v1433 = vpop.f32.mrf.mxu0
    %v1434 = vadd.f32 %v1365, %v1433
    %v1435 = vpop.f32.mrf.mxu0
    %v1436 = vadd.f32 %v1367, %v1435
    %1437 = vmatmul.bf16.gmra.mxu0 %v803
    %v1438 = vpop.f32.mrf.mxu0
    %v1439 = vadd.f32 %v1370, %v1438
    %v1440 = vpop.f32.mrf.mxu0
    %v1441 = vadd.f32 %v1372, %v1440
    %1442 = vmatmul.bf16.gmra.mxu0 %v808
    %v1443 = vpop.f32.mrf.mxu0
    %v1444 = vadd.f32 %v1375, %v1443
    %v1445 = vpop.f32.mrf.mxu0
    %v1446 = vadd.f32 %v1377, %v1445
    %1447 = vdwg.mxu0
    %1448 = vmatpush.bf16.msra.mxu0 %v472
    %1449 = vmatpush.bf16.msra.mxu0 %v470
    %1450 = vmatpush.bf16.msra.mxu0 %v468
    %1451 = vmatpush.bf16.msra.mxu0 %v466
    %1452 = vmatpush.bf16.msra.mxu0 %v464
    %1453 = vmatpush.bf16.msra.mxu0 %v462
    %1454 = vmatpush.bf16.msra.mxu0 %v460
    %1455 = vmatpush.bf16.msra.mxu0 %v458
    %1456 = vmatmul.bf16.gmra.mxu0 %v754
    %v1457 = vpop.f32.mrf.mxu0
    %v1458 = vadd.f32 %v1389, %v1457
    %v1459 = vpop.f32.mrf.mxu0
    %v1460 = vadd.f32 %v1391, %v1459
    %1461 = vmatmul.bf16.gmra.mxu0 %v759
    %v1462 = vpop.f32.mrf.mxu0
    %v1463 = vadd.f32 %v1394, %v1462
    %v1464 = vpop.f32.mrf.mxu0
    %v1465 = vadd.f32 %v1396, %v1464
    %1466 = vmatmul.bf16.gmra.mxu0 %v764
    %v1467 = vpop.f32.mrf.mxu0
    %v1468 = vadd.f32 %v1399, %v1467
    %v1469 = vpop.f32.mrf.mxu0
    %v1470 = vadd.f32 %v1401, %v1469
    %1471 = vmatmul.bf16.gmra.mxu0 %v769
    %v1472 = vpop.f32.mrf.mxu0
    %v1473 = vadd.f32 %v1404, %v1472
    %v1474 = vpop.f32.mrf.mxu0
    %v1475 = vadd.f32 %v1406, %v1474
    %1476 = vmatmul.bf16.gmra.mxu0 %v774
    %v1477 = vpop.f32.mrf.mxu0
    %v1478 = vadd.f32 %v1409, %v1477
    %v1479 = vpop.f32.mrf.mxu0
    %v1480 = vadd.f32 %v1411, %v1479
    %1481 = vmatmul.bf16.gmra.mxu0 %v779
    %v1482 = vpop.f32.mrf.mxu0
    %v1483 = vadd.f32 %v1414, %v1482
    %v1484 = vpop.f32.mrf.mxu0
    %v1485 = vadd.f32 %v1416, %v1484
    %1486 = vmatmul.bf16.gmra.mxu0 %v784
    %v1487 = vpop.f32.mrf.mxu0
    %v1488 = vadd.f32 %v1419, %v1487
    %v1489 = vpop.f32.mrf.mxu0
    %v1490 = vadd.f32 %v1421, %v1489
    %1491 = vmatmul.bf16.gmra.mxu0 %v789
    %v1492 = vpop.f32.mrf.mxu0
    %v1493 = vadd.f32 %v1424, %v1492
    %v1494 = vpop.f32.mrf.mxu0
    %v1495 = vadd.f32 %v1426, %v1494
    %1496 = vmatmul.bf16.gmra.mxu0 %v794
    %v1497 = vpop.f32.mrf.mxu0
    %v1498 = vadd.f32 %v1429, %v1497
    %v1499 = vpop.f32.mrf.mxu0
    %v1500 = vadd.f32 %v1431, %v1499
    %1501 = vmatmul.bf16.gmra.mxu0 %v799
    %v1502 = vpop.f32.mrf.mxu0
    %v1503 = vadd.f32 %v1434, %v1502
    %v1504 = vpop.f32.mrf.mxu0
    %v1505 = vadd.f32 %v1436, %v1504
    %1506 = vmatmul.bf16.gmra.mxu0 %v804
    %v1507 = vpop.f32.mrf.mxu0
    %v1508 = vadd.f32 %v1439, %v1507
    %v1509 = vpop.f32.mrf.mxu0
    %v1510 = vadd.f32 %v1441, %v1509
    %1511 = vmatmul.bf16.gmra.mxu0 %v809
    %v1512 = vpop.f32.mrf.mxu0
    %v1513 = vadd.f32 %v1444, %v1512
    %v1514 = vpop.f32.mrf.mxu0
    %v1515 = vadd.f32 %v1446, %v1514
    %1516 = vdwg.mxu0
    %1517 = vmatpush.bf16.msra.mxu0 0
    %1518 = vmatpush.bf16.msra.mxu0 %v486
    %1519 = vmatpush.bf16.msra.mxu0 %v484
    %1520 = vmatpush.bf16.msra.mxu0 %v482
    %1521 = vmatpush.bf16.msra.mxu0 %v480
    %1522 = vmatpush.bf16.msra.mxu0 %v478
    %1523 = vmatpush.bf16.msra.mxu0 %v476
    %1524 = vmatpush.bf16.msra.mxu0 %v474
    %1525 = vmatmul.bf16.gmra.mxu0 %v861
    %v1526 = vpop.f32.mrf.mxu0
    %v1527 = vadd.f32 %v1458, %v1526
    %v1528 = vpop.f32.mrf.mxu0
    %v1529 = vadd.f32 %v1460, %v1528
    %1530 = vmatmul.bf16.gmra.mxu0 %v864
    %v1531 = vpop.f32.mrf.mxu0
    %v1532 = vadd.f32 %v1463, %v1531
    %v1533 = vpop.f32.mrf.mxu0
    %v1534 = vadd.f32 %v1465, %v1533
    %1535 = vmatmul.bf16.gmra.mxu0 %v867
    %v1536 = vpop.f32.mrf.mxu0
    %v1537 = vadd.f32 %v1468, %v1536
    %v1538 = vpop.f32.mrf.mxu0
    %v1539 = vadd.f32 %v1470, %v1538
    %1540 = vmatmul.bf16.gmra.mxu0 %v870
    %v1541 = vpop.f32.mrf.mxu0
    %v1542 = vadd.f32 %v1473, %v1541
    %v1543 = vpop.f32.mrf.mxu0
    %v1544 = vadd.f32 %v1475, %v1543
    %1545 = vmatmul.bf16.gmra.mxu0 %v873
    %v1546 = vpop.f32.mrf.mxu0
    %v1547 = vadd.f32 %v1478, %v1546
    %v1548 = vpop.f32.mrf.mxu0
    %v1549 = vadd.f32 %v1480, %v1548
    %1550 = vmatmul.bf16.gmra.mxu0 %v876
    %v1551 = vpop.f32.mrf.mxu0
    %v1552 = vadd.f32 %v1483, %v1551
    %v1553 = vpop.f32.mrf.mxu0
    %v1554 = vadd.f32 %v1485, %v1553
    %1555 = vmatmul.bf16.gmra.mxu0 %v879
    %v1556 = vpop.f32.mrf.mxu0
    %v1557 = vadd.f32 %v1488, %v1556
    %v1558 = vpop.f32.mrf.mxu0
    %v1559 = vadd.f32 %v1490, %v1558
    %1560 = vmatmul.bf16.gmra.mxu0 %v882
    %v1561 = vpop.f32.mrf.mxu0
    %v1562 = vadd.f32 %v1493, %v1561
    %v1563 = vpop.f32.mrf.mxu0
    %v1564 = vadd.f32 %v1495, %v1563
    %1565 = vmatmul.bf16.gmra.mxu0 %v885
    %v1566 = vpop.f32.mrf.mxu0
    %v1567 = vadd.f32 %v1498, %v1566
    %v1568 = vpop.f32.mrf.mxu0
    %v1569 = vadd.f32 %v1500, %v1568
    %1570 = vmatmul.bf16.gmra.mxu0 %v888
    %v1571 = vpop.f32.mrf.mxu0
    %v1572 = vadd.f32 %v1503, %v1571
    %v1573 = vpop.f32.mrf.mxu0
    %v1574 = vadd.f32 %v1505, %v1573
    %1575 = vmatmul.bf16.gmra.mxu0 %v891
    %v1576 = vpop.f32.mrf.mxu0
    %v1577 = vadd.f32 %v1508, %v1576
    %v1578 = vpop.f32.mrf.mxu0
    %v1579 = vadd.f32 %v1510, %v1578
    %1580 = vmatmul.bf16.gmra.mxu0 %v894
    %v1581 = vpop.f32.mrf.mxu0
    %v1582 = vadd.f32 %v1513, %v1581
    %v1583 = vpop.f32.mrf.mxu0
    %v1584 = vadd.f32 %v1515, %v1583
    %1585 = vdwg.mxu0
    %vm1586 = vcmask 556032
    %v1587 = vsel %vm1586, %v1527, 0.0
    %v1588 = vadd.f32 %v1182, %v1587
    %1589 = vadd.xlane.f32.xlu0 %v1588
    %v1590 = vpop.xlane.xlu0 %1589
    %v1591 = vsel %vm1586, %v1529, 0.0
    %v1592 = vadd.f32 %v1184, %v1591
    %1593 = vadd.xlane.f32.xlu0 %v1592
    %v1594 = vpop.xlane.xlu0 %1593
    %v1595 = vsel %vm1586, %v1532, 0.0
    %v1596 = vadd.f32 %v1187, %v1595
    %1597 = vadd.xlane.f32.xlu0 %v1596
    %v1598 = vpop.xlane.xlu0 %1597
    %v1599 = vsel %vm1586, %v1534, 0.0
    %v1600 = vadd.f32 %v1189, %v1599
    %1601 = vadd.xlane.f32.xlu0 %v1600
    %v1602 = vpop.xlane.xlu0 %1601
    %v1603 = vsel %vm1586, %v1537, 0.0
    %v1604 = vadd.f32 %v1192, %v1603
    %1605 = vadd.xlane.f32.xlu0 %v1604
    %v1606 = vpop.xlane.xlu0 %1605
    %v1607 = vsel %vm1586, %v1539, 0.0
    %v1608 = vadd.f32 %v1194, %v1607
    %1609 = vadd.xlane.f32.xlu0 %v1608
    %v1610 = vpop.xlane.xlu0 %1609
    %v1611 = vsel %vm1586, %v1542, 0.0
    %v1612 = vadd.f32 %v1197, %v1611
    %1613 = vadd.xlane.f32.xlu0 %v1612
    %v1614 = vpop.xlane.xlu0 %1613
    %v1615 = vsel %vm1586, %v1544, 0.0
    %v1616 = vadd.f32 %v1199, %v1615
    %1617 = vadd.xlane.f32.xlu0 %v1616
    %v1618 = vpop.xlane.xlu0 %1617
    %v1619 = vsel %vm1586, %v1547, 0.0
    %v1620 = vadd.f32 %v1202, %v1619
    %1621 = vadd.xlane.f32.xlu0 %v1620
    %v1622 = vpop.xlane.xlu0 %1621
    %v1623 = vsel %vm1586, %v1549, 0.0
    %v1624 = vadd.f32 %v1204, %v1623
    %1625 = vadd.xlane.f32.xlu0 %v1624
    %v1626 = vpop.xlane.xlu0 %1625
    %v1627 = vsel %vm1586, %v1552, 0.0
    %v1628 = vadd.f32 %v1207, %v1627
    %1629 = vadd.xlane.f32.xlu0 %v1628
    %v1630 = vpop.xlane.xlu0 %1629
    %v1631 = vsel %vm1586, %v1554, 0.0
    %v1632 = vadd.f32 %v1209, %v1631
    %1633 = vadd.xlane.f32.xlu0 %v1632
    %v1634 = vpop.xlane.xlu0 %1633
    %v1635 = vsel %vm1586, %v1557, 0.0
    %v1636 = vadd.f32 %v1212, %v1635
    %1637 = vadd.xlane.f32.xlu0 %v1636
    %v1638 = vpop.xlane.xlu0 %1637
    %v1639 = vsel %vm1586, %v1559, 0.0
    %v1640 = vadd.f32 %v1214, %v1639
    %1641 = vadd.xlane.f32.xlu0 %v1640
    %v1642 = vpop.xlane.xlu0 %1641
    %v1643 = vsel %vm1586, %v1562, 0.0
    %v1644 = vadd.f32 %v1217, %v1643
    %1645 = vadd.xlane.f32.xlu0 %v1644
    %v1646 = vpop.xlane.xlu0 %1645
    %v1647 = vsel %vm1586, %v1564, 0.0
    %v1648 = vadd.f32 %v1219, %v1647
    %1649 = vadd.xlane.f32.xlu0 %v1648
    %v1650 = vpop.xlane.xlu0 %1649
    %v1651 = vsel %vm1586, %v1567, 0.0
    %v1652 = vadd.f32 %v1222, %v1651
    %1653 = vadd.xlane.f32.xlu0 %v1652
    %v1654 = vpop.xlane.xlu0 %1653
    %v1655 = vsel %vm1586, %v1569, 0.0
    %v1656 = vadd.f32 %v1224, %v1655
    %1657 = vadd.xlane.f32.xlu0 %v1656
    %v1658 = vpop.xlane.xlu0 %1657
    %v1659 = vsel %vm1586, %v1572, 0.0
    %v1660 = vadd.f32 %v1227, %v1659
    %1661 = vadd.xlane.f32.xlu0 %v1660
    %v1662 = vpop.xlane.xlu0 %1661
    %v1663 = vsel %vm1586, %v1574, 0.0
    %v1664 = vadd.f32 %v1229, %v1663
    %1665 = vadd.xlane.f32.xlu0 %v1664
    %v1666 = vpop.xlane.xlu0 %1665
    %v1667 = vsel %vm1586, %v1577, 0.0
    %v1668 = vadd.f32 %v1232, %v1667
    %1669 = vadd.xlane.f32.xlu0 %v1668
    %v1670 = vpop.xlane.xlu0 %1669
    %v1671 = vsel %vm1586, %v1579, 0.0
    %v1672 = vadd.f32 %v1234, %v1671
    %1673 = vadd.xlane.f32.xlu0 %v1672
    %v1674 = vpop.xlane.xlu0 %1673
    %v1675 = vsel %vm1586, %v1582, 0.0
    %v1676 = vadd.f32 %v1237, %v1675
    %1677 = vadd.xlane.f32.xlu0 %v1676
    %v1678 = vpop.xlane.xlu0 %1677
    %v1679 = vsel %vm1586, %v1584, 0.0
    %v1680 = vadd.f32 %v1239, %v1679
    %1681 = vadd.xlane.f32.xlu0 %v1680
    %v1682 = vpop.xlane.xlu0 %1681
    %v1683 = vmul.f32 %v1182, %v1182
    %v1684 = vmul.f32 %v1527, %v1527
    %v1685 = vmul.f32 %v1184, %v1184
    %v1686 = vmul.f32 %v1529, %v1529
    %v1687 = vmul.f32 %v1187, %v1187
    %v1688 = vmul.f32 %v1532, %v1532
    %v1689 = vmul.f32 %v1189, %v1189
    %v1690 = vmul.f32 %v1534, %v1534
    %v1691 = vmul.f32 %v1192, %v1192
    %v1692 = vmul.f32 %v1537, %v1537
    %v1693 = vmul.f32 %v1194, %v1194
    %v1694 = vmul.f32 %v1539, %v1539
    %v1695 = vmul.f32 %v1197, %v1197
    %v1696 = vmul.f32 %v1542, %v1542
    %v1697 = vmul.f32 %v1199, %v1199
    %v1698 = vmul.f32 %v1544, %v1544
    %v1699 = vmul.f32 %v1202, %v1202
    %v1700 = vmul.f32 %v1547, %v1547
    %v1701 = vmul.f32 %v1204, %v1204
    %v1702 = vmul.f32 %v1549, %v1549
    %v1703 = vmul.f32 %v1207, %v1207
    %v1704 = vmul.f32 %v1552, %v1552
    %v1705 = vmul.f32 %v1209, %v1209
    %v1706 = vmul.f32 %v1554, %v1554
    %v1707 = vmul.f32 %v1212, %v1212
    %v1708 = vmul.f32 %v1557, %v1557
    %v1709 = vmul.f32 %v1214, %v1214
    %v1710 = vmul.f32 %v1559, %v1559
    %v1711 = vmul.f32 %v1217, %v1217
    %v1712 = vmul.f32 %v1562, %v1562
    %v1713 = vmul.f32 %v1219, %v1219
    %v1714 = vmul.f32 %v1564, %v1564
    %v1715 = vmul.f32 %v1222, %v1222
    %v1716 = vmul.f32 %v1567, %v1567
    %v1717 = vmul.f32 %v1224, %v1224
    %v1718 = vmul.f32 %v1569, %v1569
    %v1719 = vmul.f32 %v1227, %v1227
    %v1720 = vmul.f32 %v1572, %v1572
    %v1721 = vmul.f32 %v1229, %v1229
    %v1722 = vmul.f32 %v1574, %v1574
    %v1723 = vmul.f32 %v1232, %v1232
    %v1724 = vmul.f32 %v1577, %v1577
    %v1725 = vmul.f32 %v1234, %v1234
    %v1726 = vmul.f32 %v1579, %v1579
    %v1727 = vmul.f32 %v1237, %v1237
    %v1728 = vmul.f32 %v1582, %v1582
    %v1729 = vmul.f32 %v1239, %v1239
    %v1730 = vmul.f32 %v1584, %v1584
    %v1731 = vsel %vm1586, %v1684, 0.0
    %v1732 = vadd.f32 %v1683, %v1731
    %1733 = vadd.xlane.f32.xlu0 %v1732
    %v1734 = vpop.xlane.xlu0 %1733
    %v1735 = vsel %vm1586, %v1686, 0.0
    %v1736 = vadd.f32 %v1685, %v1735
    %1737 = vadd.xlane.f32.xlu0 %v1736
    %v1738 = vpop.xlane.xlu0 %1737
    %v1739 = vsel %vm1586, %v1688, 0.0
    %v1740 = vadd.f32 %v1687, %v1739
    %1741 = vadd.xlane.f32.xlu0 %v1740
    %v1742 = vpop.xlane.xlu0 %1741
    %v1743 = vsel %vm1586, %v1690, 0.0
    %v1744 = vadd.f32 %v1689, %v1743
    %1745 = vadd.xlane.f32.xlu0 %v1744
    %v1746 = vpop.xlane.xlu0 %1745
    %v1747 = vsel %vm1586, %v1692, 0.0
    %v1748 = vadd.f32 %v1691, %v1747
    %1749 = vadd.xlane.f32.xlu0 %v1748
    %v1750 = vpop.xlane.xlu0 %1749
    %v1751 = vsel %vm1586, %v1694, 0.0
    %v1752 = vadd.f32 %v1693, %v1751
    %1753 = vadd.xlane.f32.xlu0 %v1752
    %v1754 = vpop.xlane.xlu0 %1753
    %v1755 = vsel %vm1586, %v1696, 0.0
    %v1756 = vadd.f32 %v1695, %v1755
    %1757 = vadd.xlane.f32.xlu0 %v1756
    %v1758 = vpop.xlane.xlu0 %1757
    %v1759 = vsel %vm1586, %v1698, 0.0
    %v1760 = vadd.f32 %v1697, %v1759
    %1761 = vadd.xlane.f32.xlu0 %v1760
    %v1762 = vpop.xlane.xlu0 %1761
    %v1763 = vsel %vm1586, %v1700, 0.0
    %v1764 = vadd.f32 %v1699, %v1763
    %1765 = vadd.xlane.f32.xlu0 %v1764
    %v1766 = vpop.xlane.xlu0 %1765
    %v1767 = vsel %vm1586, %v1702, 0.0
    %v1768 = vadd.f32 %v1701, %v1767
    %1769 = vadd.xlane.f32.xlu0 %v1768
    %v1770 = vpop.xlane.xlu0 %1769
    %v1771 = vsel %vm1586, %v1704, 0.0
    %v1772 = vadd.f32 %v1703, %v1771
    %1773 = vadd.xlane.f32.xlu0 %v1772
    %v1774 = vpop.xlane.xlu0 %1773
    %v1775 = vsel %vm1586, %v1706, 0.0
    %v1776 = vadd.f32 %v1705, %v1775
    %1777 = vadd.xlane.f32.xlu0 %v1776
    %v1778 = vpop.xlane.xlu0 %1777
    %v1779 = vsel %vm1586, %v1708, 0.0
    %v1780 = vadd.f32 %v1707, %v1779
    %1781 = vadd.xlane.f32.xlu0 %v1780
    %v1782 = vpop.xlane.xlu0 %1781
    %v1783 = vsel %vm1586, %v1710, 0.0
    %v1784 = vadd.f32 %v1709, %v1783
    %1785 = vadd.xlane.f32.xlu0 %v1784
    %v1786 = vpop.xlane.xlu0 %1785
    %v1787 = vsel %vm1586, %v1712, 0.0
    %v1788 = vadd.f32 %v1711, %v1787
    %1789 = vadd.xlane.f32.xlu0 %v1788
    %v1790 = vpop.xlane.xlu0 %1789
    %v1791 = vsel %vm1586, %v1714, 0.0
    %v1792 = vadd.f32 %v1713, %v1791
    %1793 = vadd.xlane.f32.xlu0 %v1792
    %v1794 = vpop.xlane.xlu0 %1793
    %v1795 = vsel %vm1586, %v1716, 0.0
    %v1796 = vadd.f32 %v1715, %v1795
    %1797 = vadd.xlane.f32.xlu0 %v1796
    %v1798 = vpop.xlane.xlu0 %1797
    %v1799 = vsel %vm1586, %v1718, 0.0
    %v1800 = vadd.f32 %v1717, %v1799
    %1801 = vadd.xlane.f32.xlu0 %v1800
    %v1802 = vpop.xlane.xlu0 %1801
    %v1803 = vsel %vm1586, %v1720, 0.0
    %v1804 = vadd.f32 %v1719, %v1803
    %1805 = vadd.xlane.f32.xlu0 %v1804
    %v1806 = vpop.xlane.xlu0 %1805
    %v1807 = vsel %vm1586, %v1722, 0.0
    %v1808 = vadd.f32 %v1721, %v1807
    %1809 = vadd.xlane.f32.xlu0 %v1808
    %v1810 = vpop.xlane.xlu0 %1809
    %v1811 = vsel %vm1586, %v1724, 0.0
    %v1812 = vadd.f32 %v1723, %v1811
    %1813 = vadd.xlane.f32.xlu0 %v1812
    %v1814 = vpop.xlane.xlu0 %1813
    %v1815 = vsel %vm1586, %v1726, 0.0
    %v1816 = vadd.f32 %v1725, %v1815
    %1817 = vadd.xlane.f32.xlu0 %v1816
    %v1818 = vpop.xlane.xlu0 %1817
    %v1819 = vsel %vm1586, %v1728, 0.0
    %v1820 = vadd.f32 %v1727, %v1819
    %1821 = vadd.xlane.f32.xlu0 %v1820
    %v1822 = vpop.xlane.xlu0 %1821
    %v1823 = vsel %vm1586, %v1730, 0.0
    %v1824 = vadd.f32 %v1729, %v1823
    %1825 = vadd.xlane.f32.xlu0 %v1824
    %v1826 = vpop.xlane.xlu0 %1825
    %v1827 = vmul.f32 %v1590, 0.0051020407
    %v1828 = vmul.f32 %v1594, 0.0051020407
    %v1829 = vmul.f32 %v1598, 0.0051020407
    %v1830 = vmul.f32 %v1602, 0.0051020407
    %v1831 = vmul.f32 %v1606, 0.0051020407
    %v1832 = vmul.f32 %v1610, 0.0051020407
    %v1833 = vmul.f32 %v1614, 0.0051020407
    %v1834 = vmul.f32 %v1618, 0.0051020407
    %v1835 = vmul.f32 %v1622, 0.0051020407
    %v1836 = vmul.f32 %v1626, 0.0051020407
    %v1837 = vmul.f32 %v1630, 0.0051020407
    %v1838 = vmul.f32 %v1634, 0.0051020407
    %v1839 = vmul.f32 %v1638, 0.0051020407
    %v1840 = vmul.f32 %v1642, 0.0051020407
    %v1841 = vmul.f32 %v1646, 0.0051020407
    %v1842 = vmul.f32 %v1650, 0.0051020407
    %v1843 = vmul.f32 %v1654, 0.0051020407
    %v1844 = vmul.f32 %v1658, 0.0051020407
    %v1845 = vmul.f32 %v1662, 0.0051020407
    %v1846 = vmul.f32 %v1666, 0.0051020407
    %v1847 = vmul.f32 %v1670, 0.0051020407
    %v1848 = vmul.f32 %v1674, 0.0051020407
    %v1849 = vmul.f32 %v1678, 0.0051020407
    %v1850 = vmul.f32 %v1682, 0.0051020407
    %v1851 = vmul.f32 %v1734, 0.0051020407
    %v1852 = vmul.f32 %v1738, 0.0051020407
    %v1853 = vmul.f32 %v1742, 0.0051020407
    %v1854 = vmul.f32 %v1746, 0.0051020407
    %v1855 = vmul.f32 %v1750, 0.0051020407
    %v1856 = vmul.f32 %v1754, 0.0051020407
    %v1857 = vmul.f32 %v1758, 0.0051020407
    %v1858 = vmul.f32 %v1762, 0.0051020407
    %v1859 = vmul.f32 %v1766, 0.0051020407
    %v1860 = vmul.f32 %v1770, 0.0051020407
    %v1861 = vmul.f32 %v1774, 0.0051020407
    %v1862 = vmul.f32 %v1778, 0.0051020407
    %v1863 = vmul.f32 %v1782, 0.0051020407
    %v1864 = vmul.f32 %v1786, 0.0051020407
    %v1865 = vmul.f32 %v1790, 0.0051020407
    %v1866 = vmul.f32 %v1794, 0.0051020407
    %v1867 = vmul.f32 %v1798, 0.0051020407
    %v1868 = vmul.f32 %v1802, 0.0051020407
    %v1869 = vmul.f32 %v1806, 0.0051020407
    %v1870 = vmul.f32 %v1810, 0.0051020407
    %v1871 = vmul.f32 %v1814, 0.0051020407
    %v1872 = vmul.f32 %v1818, 0.0051020407
    %v1873 = vmul.f32 %v1822, 0.0051020407
    %v1874 = vmul.f32 %v1826, 0.0051020407
    %v1875 = vmul.f32 %v1827, %v1827
    %v1876 = vmul.f32 %v1828, %v1828
    %v1877 = vmul.f32 %v1829, %v1829
    %v1878 = vmul.f32 %v1830, %v1830
    %v1879 = vmul.f32 %v1831, %v1831
    %v1880 = vmul.f32 %v1832, %v1832
    %v1881 = vmul.f32 %v1833, %v1833
    %v1882 = vmul.f32 %v1834, %v1834
    %v1883 = vmul.f32 %v1835, %v1835
    %v1884 = vmul.f32 %v1836, %v1836
    %v1885 = vmul.f32 %v1837, %v1837
    %v1886 = vmul.f32 %v1838, %v1838
    %v1887 = vmul.f32 %v1839, %v1839
    %v1888 = vmul.f32 %v1840, %v1840
    %v1889 = vmul.f32 %v1841, %v1841
    %v1890 = vmul.f32 %v1842, %v1842
    %v1891 = vmul.f32 %v1843, %v1843
    %v1892 = vmul.f32 %v1844, %v1844
    %v1893 = vmul.f32 %v1845, %v1845
    %v1894 = vmul.f32 %v1846, %v1846
    %v1895 = vmul.f32 %v1847, %v1847
    %v1896 = vmul.f32 %v1848, %v1848
    %v1897 = vmul.f32 %v1849, %v1849
    %v1898 = vmul.f32 %v1850, %v1850
    %v1899 = vsub.f32 %v1851, %v1875
    %v1900 = vsub.f32 %v1852, %v1876
    %v1901 = vsub.f32 %v1853, %v1877
    %v1902 = vsub.f32 %v1854, %v1878
    %v1903 = vsub.f32 %v1855, %v1879
    %v1904 = vsub.f32 %v1856, %v1880
    %v1905 = vsub.f32 %v1857, %v1881
    %v1906 = vsub.f32 %v1858, %v1882
    %v1907 = vsub.f32 %v1859, %v1883
    %v1908 = vsub.f32 %v1860, %v1884
    %v1909 = vsub.f32 %v1861, %v1885
    %v1910 = vsub.f32 %v1862, %v1886
    %v1911 = vsub.f32 %v1863, %v1887
    %v1912 = vsub.f32 %v1864, %v1888
    %v1913 = vsub.f32 %v1865, %v1889
    %v1914 = vsub.f32 %v1866, %v1890
    %v1915 = vsub.f32 %v1867, %v1891
    %v1916 = vsub.f32 %v1868, %v1892
    %v1917 = vsub.f32 %v1869, %v1893
    %v1918 = vsub.f32 %v1870, %v1894
    %v1919 = vsub.f32 %v1871, %v1895
    %v1920 = vsub.f32 %v1872, %v1896
    %v1921 = vsub.f32 %v1873, %v1897
    %v1922 = vsub.f32 %v1874, %v1898
    %v1923 = vadd.f32 %v1899, 1e-05
    %v1924 = vadd.f32 %v1900, 1e-05
    %v1925 = vadd.f32 %v1901, 1e-05
    %v1926 = vadd.f32 %v1902, 1e-05
    %v1927 = vadd.f32 %v1903, 1e-05
    %v1928 = vadd.f32 %v1904, 1e-05
    %v1929 = vadd.f32 %v1905, 1e-05
    %v1930 = vadd.f32 %v1906, 1e-05
    %v1931 = vadd.f32 %v1907, 1e-05
    %v1932 = vadd.f32 %v1908, 1e-05
    %v1933 = vadd.f32 %v1909, 1e-05
    %v1934 = vadd.f32 %v1910, 1e-05
    %v1935 = vadd.f32 %v1911, 1e-05
    %v1936 = vadd.f32 %v1912, 1e-05
    %v1937 = vadd.f32 %v1913, 1e-05
    %v1938 = vadd.f32 %v1914, 1e-05
    %v1939 = vadd.f32 %v1915, 1e-05
    %v1940 = vadd.f32 %v1916, 1e-05
    %v1941 = vadd.f32 %v1917, 1e-05
    %v1942 = vadd.f32 %v1918, 1e-05
    %v1943 = vadd.f32 %v1919, 1e-05
    %v1944 = vadd.f32 %v1920, 1e-05
    %v1945 = vadd.f32 %v1921, 1e-05
    %v1946 = vadd.f32 %v1922, 1e-05
    %v1947 = vrsqrt.pop %v1923
    %v1948 = vmul.f32 %v1947, %v1923
    %v1949 = vmul.f32 %v1948, %v1947
    %v1950 = vmul.f32 0.5, %v1949
    %v1951 = vsub.f32 1.5, %v1950
    %v1952 = vmul.f32 %v1947, %v1951
    %vm1953 = vweird.f32 %v1923
    %vm1954 = vweird.f32 %v1947
    %vm1955 = vmor %vm1953, %vm1954
    %v1956 = vsel %vm1955, %v1947, %v1952
    %v1957 = vrsqrt.pop %v1924
    %v1958 = vmul.f32 %v1957, %v1924
    %v1959 = vmul.f32 %v1958, %v1957
    %v1960 = vmul.f32 0.5, %v1959
    %v1961 = vsub.f32 1.5, %v1960
    %v1962 = vmul.f32 %v1957, %v1961
    %vm1963 = vweird.f32 %v1924
    %vm1964 = vweird.f32 %v1957
    %vm1965 = vmor %vm1963, %vm1964
    %v1966 = vsel %vm1965, %v1957, %v1962
    %v1967 = vrsqrt.pop %v1925
    %v1968 = vmul.f32 %v1967, %v1925
    %v1969 = vmul.f32 %v1968, %v1967
    %v1970 = vmul.f32 0.5, %v1969
    %v1971 = vsub.f32 1.5, %v1970
    %v1972 = vmul.f32 %v1967, %v1971
    %vm1973 = vweird.f32 %v1925
    %vm1974 = vweird.f32 %v1967
    %vm1975 = vmor %vm1973, %vm1974
    %v1976 = vsel %vm1975, %v1967, %v1972
    %v1977 = vrsqrt.pop %v1926
    %v1978 = vmul.f32 %v1977, %v1926
    %v1979 = vmul.f32 %v1978, %v1977
    %v1980 = vmul.f32 0.5, %v1979
    %v1981 = vsub.f32 1.5, %v1980
    %v1982 = vmul.f32 %v1977, %v1981
    %vm1983 = vweird.f32 %v1926
    %vm1984 = vweird.f32 %v1977
    %vm1985 = vmor %vm1983, %vm1984
    %v1986 = vsel %vm1985, %v1977, %v1982
    %v1987 = vrsqrt.pop %v1927
    %v1988 = vmul.f32 %v1987, %v1927
    %v1989 = vmul.f32 %v1988, %v1987
    %v1990 = vmul.f32 0.5, %v1989
    %v1991 = vsub.f32 1.5, %v1990
    %v1992 = vmul.f32 %v1987, %v1991
    %vm1993 = vweird.f32 %v1927
    %vm1994 = vweird.f32 %v1987
    %vm1995 = vmor %vm1993, %vm1994
    %v1996 = vsel %vm1995, %v1987, %v1992
    %v1997 = vrsqrt.pop %v1928
    %v1998 = vmul.f32 %v1997, %v1928
    %v1999 = vmul.f32 %v1998, %v1997
    %v2000 = vmul.f32 0.5, %v1999
    %v2001 = vsub.f32 1.5, %v2000
    %v2002 = vmul.f32 %v1997, %v2001
    %vm2003 = vweird.f32 %v1928
    %vm2004 = vweird.f32 %v1997
    %vm2005 = vmor %vm2003, %vm2004
    %v2006 = vsel %vm2005, %v1997, %v2002
    %v2007 = vrsqrt.pop %v1929
    %v2008 = vmul.f32 %v2007, %v1929
    %v2009 = vmul.f32 %v2008, %v2007
    %v2010 = vmul.f32 0.5, %v2009
    %v2011 = vsub.f32 1.5, %v2010
    %v2012 = vmul.f32 %v2007, %v2011
    %vm2013 = vweird.f32 %v1929
    %vm2014 = vweird.f32 %v2007
    %vm2015 = vmor %vm2013, %vm2014
    %v2016 = vsel %vm2015, %v2007, %v2012
    %v2017 = vrsqrt.pop %v1930
    %v2018 = vmul.f32 %v2017, %v1930
    %v2019 = vmul.f32 %v2018, %v2017
    %v2020 = vmul.f32 0.5, %v2019
    %v2021 = vsub.f32 1.5, %v2020
    %v2022 = vmul.f32 %v2017, %v2021
    %vm2023 = vweird.f32 %v1930
    %vm2024 = vweird.f32 %v2017
    %vm2025 = vmor %vm2023, %vm2024
    %v2026 = vsel %vm2025, %v2017, %v2022
    %v2027 = vrsqrt.pop %v1931
    %v2028 = vmul.f32 %v2027, %v1931
    %v2029 = vmul.f32 %v2028, %v2027
    %v2030 = vmul.f32 0.5, %v2029
    %v2031 = vsub.f32 1.5, %v2030
    %v2032 = vmul.f32 %v2027, %v2031
    %vm2033 = vweird.f32 %v1931
    %vm2034 = vweird.f32 %v2027
    %vm2035 = vmor %vm2033, %vm2034
    %v2036 = vsel %vm2035, %v2027, %v2032
    %v2037 = vrsqrt.pop %v1932
    %v2038 = vmul.f32 %v2037, %v1932
    %v2039 = vmul.f32 %v2038, %v2037
    %v2040 = vmul.f32 0.5, %v2039
    %v2041 = vsub.f32 1.5, %v2040
    %v2042 = vmul.f32 %v2037, %v2041
    %vm2043 = vweird.f32 %v1932
    %vm2044 = vweird.f32 %v2037
    %vm2045 = vmor %vm2043, %vm2044
    %v2046 = vsel %vm2045, %v2037, %v2042
    %v2047 = vrsqrt.pop %v1933
    %v2048 = vmul.f32 %v2047, %v1933
    %v2049 = vmul.f32 %v2048, %v2047
    %v2050 = vmul.f32 0.5, %v2049
    %v2051 = vsub.f32 1.5, %v2050
    %v2052 = vmul.f32 %v2047, %v2051
    %vm2053 = vweird.f32 %v1933
    %vm2054 = vweird.f32 %v2047
    %vm2055 = vmor %vm2053, %vm2054
    %v2056 = vsel %vm2055, %v2047, %v2052
    %v2057 = vrsqrt.pop %v1934
    %v2058 = vmul.f32 %v2057, %v1934
    %v2059 = vmul.f32 %v2058, %v2057
    %v2060 = vmul.f32 0.5, %v2059
    %v2061 = vsub.f32 1.5, %v2060
    %v2062 = vmul.f32 %v2057, %v2061
    %vm2063 = vweird.f32 %v1934
    %vm2064 = vweird.f32 %v2057
    %vm2065 = vmor %vm2063, %vm2064
    %v2066 = vsel %vm2065, %v2057, %v2062
    %v2067 = vrsqrt.pop %v1935
    %v2068 = vmul.f32 %v2067, %v1935
    %v2069 = vmul.f32 %v2068, %v2067
    %v2070 = vmul.f32 0.5, %v2069
    %v2071 = vsub.f32 1.5, %v2070
    %v2072 = vmul.f32 %v2067, %v2071
    %vm2073 = vweird.f32 %v1935
    %vm2074 = vweird.f32 %v2067
    %vm2075 = vmor %vm2073, %vm2074
    %v2076 = vsel %vm2075, %v2067, %v2072
    %v2077 = vrsqrt.pop %v1936
    %v2078 = vmul.f32 %v2077, %v1936
    %v2079 = vmul.f32 %v2078, %v2077
    %v2080 = vmul.f32 0.5, %v2079
    %v2081 = vsub.f32 1.5, %v2080
    %v2082 = vmul.f32 %v2077, %v2081
    %vm2083 = vweird.f32 %v1936
    %vm2084 = vweird.f32 %v2077
    %vm2085 = vmor %vm2083, %vm2084
    %v2086 = vsel %vm2085, %v2077, %v2082
    %v2087 = vrsqrt.pop %v1937
    %v2088 = vmul.f32 %v2087, %v1937
    %v2089 = vmul.f32 %v2088, %v2087
    %v2090 = vmul.f32 0.5, %v2089
    %v2091 = vsub.f32 1.5, %v2090
    %v2092 = vmul.f32 %v2087, %v2091
    %vm2093 = vweird.f32 %v1937
    %vm2094 = vweird.f32 %v2087
    %vm2095 = vmor %vm2093, %vm2094
    %v2096 = vsel %vm2095, %v2087, %v2092
    %v2097 = vrsqrt.pop %v1938
    %v2098 = vmul.f32 %v2097, %v1938
    %v2099 = vmul.f32 %v2098, %v2097
    %v2100 = vmul.f32 0.5, %v2099
    %v2101 = vsub.f32 1.5, %v2100
    %v2102 = vmul.f32 %v2097, %v2101
    %vm2103 = vweird.f32 %v1938
    %vm2104 = vweird.f32 %v2097
    %vm2105 = vmor %vm2103, %vm2104
    %v2106 = vsel %vm2105, %v2097, %v2102
    %v2107 = vrsqrt.pop %v1939
    %v2108 = vmul.f32 %v2107, %v1939
    %v2109 = vmul.f32 %v2108, %v2107
    %v2110 = vmul.f32 0.5, %v2109
    %v2111 = vsub.f32 1.5, %v2110
    %v2112 = vmul.f32 %v2107, %v2111
    %vm2113 = vweird.f32 %v1939
    %vm2114 = vweird.f32 %v2107
    %vm2115 = vmor %vm2113, %vm2114
    %v2116 = vsel %vm2115, %v2107, %v2112
    %v2117 = vrsqrt.pop %v1940
    %v2118 = vmul.f32 %v2117, %v1940
    %v2119 = vmul.f32 %v2118, %v2117
    %v2120 = vmul.f32 0.5, %v2119
    %v2121 = vsub.f32 1.5, %v2120
    %v2122 = vmul.f32 %v2117, %v2121
    %vm2123 = vweird.f32 %v1940
    %vm2124 = vweird.f32 %v2117
    %vm2125 = vmor %vm2123, %vm2124
    %v2126 = vsel %vm2125, %v2117, %v2122
    %v2127 = vrsqrt.pop %v1941
    %v2128 = vmul.f32 %v2127, %v1941
    %v2129 = vmul.f32 %v2128, %v2127
    %v2130 = vmul.f32 0.5, %v2129
    %v2131 = vsub.f32 1.5, %v2130
    %v2132 = vmul.f32 %v2127, %v2131
    %vm2133 = vweird.f32 %v1941
    %vm2134 = vweird.f32 %v2127
    %vm2135 = vmor %vm2133, %vm2134
    %v2136 = vsel %vm2135, %v2127, %v2132
    %v2137 = vrsqrt.pop %v1942
    %v2138 = vmul.f32 %v2137, %v1942
    %v2139 = vmul.f32 %v2138, %v2137
    %v2140 = vmul.f32 0.5, %v2139
    %v2141 = vsub.f32 1.5, %v2140
    %v2142 = vmul.f32 %v2137, %v2141
    %vm2143 = vweird.f32 %v1942
    %vm2144 = vweird.f32 %v2137
    %vm2145 = vmor %vm2143, %vm2144
    %v2146 = vsel %vm2145, %v2137, %v2142
    %v2147 = vrsqrt.pop %v1943
    %v2148 = vmul.f32 %v2147, %v1943
    %v2149 = vmul.f32 %v2148, %v2147
    %v2150 = vmul.f32 0.5, %v2149
    %v2151 = vsub.f32 1.5, %v2150
    %v2152 = vmul.f32 %v2147, %v2151
    %vm2153 = vweird.f32 %v1943
    %vm2154 = vweird.f32 %v2147
    %vm2155 = vmor %vm2153, %vm2154
    %v2156 = vsel %vm2155, %v2147, %v2152
    %v2157 = vrsqrt.pop %v1944
    %v2158 = vmul.f32 %v2157, %v1944
    %v2159 = vmul.f32 %v2158, %v2157
    %v2160 = vmul.f32 0.5, %v2159
    %v2161 = vsub.f32 1.5, %v2160
    %v2162 = vmul.f32 %v2157, %v2161
    %vm2163 = vweird.f32 %v1944
    %vm2164 = vweird.f32 %v2157
    %vm2165 = vmor %vm2163, %vm2164
    %v2166 = vsel %vm2165, %v2157, %v2162
    %v2167 = vrsqrt.pop %v1945
    %v2168 = vmul.f32 %v2167, %v1945
    %v2169 = vmul.f32 %v2168, %v2167
    %v2170 = vmul.f32 0.5, %v2169
    %v2171 = vsub.f32 1.5, %v2170
    %v2172 = vmul.f32 %v2167, %v2171
    %vm2173 = vweird.f32 %v1945
    %vm2174 = vweird.f32 %v2167
    %vm2175 = vmor %vm2173, %vm2174
    %v2176 = vsel %vm2175, %v2167, %v2172
    %v2177 = vrsqrt.pop %v1946
    %v2178 = vmul.f32 %v2177, %v1946
    %v2179 = vmul.f32 %v2178, %v2177
    %v2180 = vmul.f32 0.5, %v2179
    %v2181 = vsub.f32 1.5, %v2180
    %v2182 = vmul.f32 %v2177, %v2181
    %vm2183 = vweird.f32 %v1946
    %vm2184 = vweird.f32 %v2177
    %vm2185 = vmor %vm2183, %vm2184
    %v2186 = vsel %vm2185, %v2177, %v2182
    %v2187 = vld [vmem:[%s2] sm:$0xff]
    %v2188 = vld [vmem:[%s2 + $0x8] sm:$0xff]
    %v2189 = vld [vmem:[%s2 + $0x10] sm:$0xff]
    %v2190 = vld [vmem:[%s2 + $0x18] sm:$0xff]
    %v2191 = vld [vmem:[%s2 + $0x20] sm:$0xff]
    %v2192 = vld [vmem:[%s2 + $0x28] sm:$0xff]
    %v2193 = vld [vmem:[%s2 + $0x30] sm:$0xff]
    %v2194 = vld [vmem:[%s2 + $0x38] sm:$0xff]
    %v2195 = vld [vmem:[%s2 + $0x40] sm:$0xff]
    %v2196 = vld [vmem:[%s2 + $0x48] sm:$0xff]
    %v2197 = vld [vmem:[%s2 + $0x50] sm:$0xff]
    %v2198 = vld [vmem:[%s2 + $0x58] sm:$0xff]
    %v2199 = vld [vmem:[%s2 + $0x60] sm:$0xff]
    %v2200 = vld [vmem:[%s2 + $0x68] sm:$0xff]
    %v2201 = vld [vmem:[%s2 + $0x70] sm:$0xff]
    %v2202 = vld [vmem:[%s2 + $0x78] sm:$0xff]
    %v2203 = vld [vmem:[%s2 + $0x80] sm:$0xff]
    %v2204 = vld [vmem:[%s2 + $0x88] sm:$0xff]
    %v2205 = vld [vmem:[%s2 + $0x90] sm:$0xff]
    %v2206 = vld [vmem:[%s2 + $0x98] sm:$0xff]
    %v2207 = vld [vmem:[%s2 + $0xa0] sm:$0xff]
    %v2208 = vld [vmem:[%s2 + $0xa8] sm:$0xff]
    %v2209 = vld [vmem:[%s2 + $0xb0] sm:$0xff]
    %v2210 = vld [vmem:[%s2 + $0xb8] sm:$0xff]
    %v2211 = vmul.f32 %v2187, %v1956
    %v2212 = vmul.f32 %v2188, %v1966
    %v2213 = vmul.f32 %v2189, %v1976
    %v2214 = vmul.f32 %v2190, %v1986
    %v2215 = vmul.f32 %v2191, %v1996
    %v2216 = vmul.f32 %v2192, %v2006
    %v2217 = vmul.f32 %v2193, %v2016
    %v2218 = vmul.f32 %v2194, %v2026
    %v2219 = vmul.f32 %v2195, %v2036
    %v2220 = vmul.f32 %v2196, %v2046
    %v2221 = vmul.f32 %v2197, %v2056
    %v2222 = vmul.f32 %v2198, %v2066
    %v2223 = vmul.f32 %v2199, %v2076
    %v2224 = vmul.f32 %v2200, %v2086
    %v2225 = vmul.f32 %v2201, %v2096
    %v2226 = vmul.f32 %v2202, %v2106
    %v2227 = vmul.f32 %v2203, %v2116
    %v2228 = vmul.f32 %v2204, %v2126
    %v2229 = vmul.f32 %v2205, %v2136
    %v2230 = vmul.f32 %v2206, %v2146
    %v2231 = vmul.f32 %v2207, %v2156
    %v2232 = vmul.f32 %v2208, %v2166
    %v2233 = vmul.f32 %v2209, %v2176
    %v2234 = vmul.f32 %v2210, %v2186
    %v2235 = vld [vmem:[%s3] sm:$0xff]
    %v2236 = vld [vmem:[%s3 + $0x8] sm:$0xff]
    %v2237 = vld [vmem:[%s3 + $0x10] sm:$0xff]
    %v2238 = vld [vmem:[%s3 + $0x18] sm:$0xff]
    %v2239 = vld [vmem:[%s3 + $0x20] sm:$0xff]
    %v2240 = vld [vmem:[%s3 + $0x28] sm:$0xff]
    %v2241 = vld [vmem:[%s3 + $0x30] sm:$0xff]
    %v2242 = vld [vmem:[%s3 + $0x38] sm:$0xff]
    %v2243 = vld [vmem:[%s3 + $0x40] sm:$0xff]
    %v2244 = vld [vmem:[%s3 + $0x48] sm:$0xff]
    %v2245 = vld [vmem:[%s3 + $0x50] sm:$0xff]
    %v2246 = vld [vmem:[%s3 + $0x58] sm:$0xff]
    %v2247 = vld [vmem:[%s3 + $0x60] sm:$0xff]
    %v2248 = vld [vmem:[%s3 + $0x68] sm:$0xff]
    %v2249 = vld [vmem:[%s3 + $0x70] sm:$0xff]
    %v2250 = vld [vmem:[%s3 + $0x78] sm:$0xff]
    %v2251 = vld [vmem:[%s3 + $0x80] sm:$0xff]
    %v2252 = vld [vmem:[%s3 + $0x88] sm:$0xff]
    %v2253 = vld [vmem:[%s3 + $0x90] sm:$0xff]
    %v2254 = vld [vmem:[%s3 + $0x98] sm:$0xff]
    %v2255 = vld [vmem:[%s3 + $0xa0] sm:$0xff]
    %v2256 = vld [vmem:[%s3 + $0xa8] sm:$0xff]
    %v2257 = vld [vmem:[%s3 + $0xb0] sm:$0xff]
    %v2258 = vld [vmem:[%s3 + $0xb8] sm:$0xff]
    %v2259 = vmul.f32 %v1827, %v2211
    %v2260 = vmul.f32 %v1828, %v2212
    %v2261 = vmul.f32 %v1829, %v2213
    %v2262 = vmul.f32 %v1830, %v2214
    %v2263 = vmul.f32 %v1831, %v2215
    %v2264 = vmul.f32 %v1832, %v2216
    %v2265 = vmul.f32 %v1833, %v2217
    %v2266 = vmul.f32 %v1834, %v2218
    %v2267 = vmul.f32 %v1835, %v2219
    %v2268 = vmul.f32 %v1836, %v2220
    %v2269 = vmul.f32 %v1837, %v2221
    %v2270 = vmul.f32 %v1838, %v2222
    %v2271 = vmul.f32 %v1839, %v2223
    %v2272 = vmul.f32 %v1840, %v2224
    %v2273 = vmul.f32 %v1841, %v2225
    %v2274 = vmul.f32 %v1842, %v2226
    %v2275 = vmul.f32 %v1843, %v2227
    %v2276 = vmul.f32 %v1844, %v2228
    %v2277 = vmul.f32 %v1845, %v2229
    %v2278 = vmul.f32 %v1846, %v2230
    %v2279 = vmul.f32 %v1847, %v2231
    %v2280 = vmul.f32 %v1848, %v2232
    %v2281 = vmul.f32 %v1849, %v2233
    %v2282 = vmul.f32 %v1850, %v2234
    %v2283 = vsub.f32 %v2235, %v2259
    %v2284 = vsub.f32 %v2236, %v2260
    %v2285 = vsub.f32 %v2237, %v2261
    %v2286 = vsub.f32 %v2238, %v2262
    %v2287 = vsub.f32 %v2239, %v2263
    %v2288 = vsub.f32 %v2240, %v2264
    %v2289 = vsub.f32 %v2241, %v2265
    %v2290 = vsub.f32 %v2242, %v2266
    %v2291 = vsub.f32 %v2243, %v2267
    %v2292 = vsub.f32 %v2244, %v2268
    %v2293 = vsub.f32 %v2245, %v2269
    %v2294 = vsub.f32 %v2246, %v2270
    %v2295 = vsub.f32 %v2247, %v2271
    %v2296 = vsub.f32 %v2248, %v2272
    %v2297 = vsub.f32 %v2249, %v2273
    %v2298 = vsub.f32 %v2250, %v2274
    %v2299 = vsub.f32 %v2251, %v2275
    %v2300 = vsub.f32 %v2252, %v2276
    %v2301 = vsub.f32 %v2253, %v2277
    %v2302 = vsub.f32 %v2254, %v2278
    %v2303 = vsub.f32 %v2255, %v2279
    %v2304 = vsub.f32 %v2256, %v2280
    %v2305 = vsub.f32 %v2257, %v2281
    %v2306 = vsub.f32 %v2258, %v2282
    %2308 = vset.pattern.permute.xlu0 0
    %2309 = vperm.xlu0 %2308, %v2211
    %v2310 = vpop.permute.xlu0 %2309
    %2313 = vset.pattern.permute.xlu0 0
    %2314 = vperm.xlu0 %2313, %v2212
    %v2315 = vpop.permute.xlu0 %2314
    %2318 = vset.pattern.permute.xlu0 0
    %2319 = vperm.xlu0 %2318, %v2213
    %v2320 = vpop.permute.xlu0 %2319
    %2323 = vset.pattern.permute.xlu0 0
    %2324 = vperm.xlu0 %2323, %v2214
    %v2325 = vpop.permute.xlu0 %2324
    %2328 = vset.pattern.permute.xlu0 0
    %2329 = vperm.xlu0 %2328, %v2215
    %v2330 = vpop.permute.xlu0 %2329
    %2333 = vset.pattern.permute.xlu0 0
    %2334 = vperm.xlu0 %2333, %v2216
    %v2335 = vpop.permute.xlu0 %2334
    %2338 = vset.pattern.permute.xlu0 0
    %2339 = vperm.xlu0 %2338, %v2217
    %v2340 = vpop.permute.xlu0 %2339
    %2343 = vset.pattern.permute.xlu0 0
    %2344 = vperm.xlu0 %2343, %v2218
    %v2345 = vpop.permute.xlu0 %2344
    %2348 = vset.pattern.permute.xlu0 0
    %2349 = vperm.xlu0 %2348, %v2219
    %v2350 = vpop.permute.xlu0 %2349
    %2353 = vset.pattern.permute.xlu0 0
    %2354 = vperm.xlu0 %2353, %v2220
    %v2355 = vpop.permute.xlu0 %2354
    %2358 = vset.pattern.permute.xlu0 0
    %2359 = vperm.xlu0 %2358, %v2221
    %v2360 = vpop.permute.xlu0 %2359
    %2363 = vset.pattern.permute.xlu0 0
    %2364 = vperm.xlu0 %2363, %v2222
    %v2365 = vpop.permute.xlu0 %2364
    %2368 = vset.pattern.permute.xlu0 0
    %2369 = vperm.xlu0 %2368, %v2223
    %v2370 = vpop.permute.xlu0 %2369
    %2373 = vset.pattern.permute.xlu0 0
    %2374 = vperm.xlu0 %2373, %v2224
    %v2375 = vpop.permute.xlu0 %2374
    %2378 = vset.pattern.permute.xlu0 0
    %2379 = vperm.xlu0 %2378, %v2225
    %v2380 = vpop.permute.xlu0 %2379
    %2383 = vset.pattern.permute.xlu0 0
    %2384 = vperm.xlu0 %2383, %v2226
    %v2385 = vpop.permute.xlu0 %2384
    %2388 = vset.pattern.permute.xlu0 0
    %2389 = vperm.xlu0 %2388, %v2227
    %v2390 = vpop.permute.xlu0 %2389
    %2393 = vset.pattern.permute.xlu0 0
    %2394 = vperm.xlu0 %2393, %v2228
    %v2395 = vpop.permute.xlu0 %2394
    %2398 = vset.pattern.permute.xlu0 0
    %2399 = vperm.xlu0 %2398, %v2229
    %v2400 = vpop.permute.xlu0 %2399
    %2403 = vset.pattern.permute.xlu0 0
    %2404 = vperm.xlu0 %2403, %v2230
    %v2405 = vpop.permute.xlu0 %2404
    %2408 = vset.pattern.permute.xlu0 0
    %2409 = vperm.xlu0 %2408, %v2231
    %v2410 = vpop.permute.xlu0 %2409
    %2413 = vset.pattern.permute.xlu0 0
    %2414 = vperm.xlu0 %2413, %v2232
    %v2415 = vpop.permute.xlu0 %2414
    %2418 = vset.pattern.permute.xlu0 0
    %2419 = vperm.xlu0 %2418, %v2233
    %v2420 = vpop.permute.xlu0 %2419
    %2423 = vset.pattern.permute.xlu0 0
    %2424 = vperm.xlu0 %2423, %v2234
    %v2425 = vpop.permute.xlu0 %2424
    %v2427 = vmul.f32 %v1182, %v2310
    %v2428 = vmul.f32 %v1527, %v2310
    %v2429 = vmul.f32 %v1184, %v2315
    %v2430 = vmul.f32 %v1529, %v2315
    %v2431 = vmul.f32 %v1187, %v2320
    %v2432 = vmul.f32 %v1532, %v2320
    %v2433 = vmul.f32 %v1189, %v2325
    %v2434 = vmul.f32 %v1534, %v2325
    %v2435 = vmul.f32 %v1192, %v2330
    %v2436 = vmul.f32 %v1537, %v2330
    %v2437 = vmul.f32 %v1194, %v2335
    %v2438 = vmul.f32 %v1539, %v2335
    %v2439 = vmul.f32 %v1197, %v2340
    %v2440 = vmul.f32 %v1542, %v2340
    %v2441 = vmul.f32 %v1199, %v2345
    %v2442 = vmul.f32 %v1544, %v2345
    %v2443 = vmul.f32 %v1202, %v2350
    %v2444 = vmul.f32 %v1547, %v2350
    %v2445 = vmul.f32 %v1204, %v2355
    %v2446 = vmul.f32 %v1549, %v2355
    %v2447 = vmul.f32 %v1207, %v2360
    %v2448 = vmul.f32 %v1552, %v2360
    %v2449 = vmul.f32 %v1209, %v2365
    %v2450 = vmul.f32 %v1554, %v2365
    %v2451 = vmul.f32 %v1212, %v2370
    %v2452 = vmul.f32 %v1557, %v2370
    %v2453 = vmul.f32 %v1214, %v2375
    %v2454 = vmul.f32 %v1559, %v2375
    %v2455 = vmul.f32 %v1217, %v2380
    %v2456 = vmul.f32 %v1562, %v2380
    %v2457 = vmul.f32 %v1219, %v2385
    %v2458 = vmul.f32 %v1564, %v2385
    %v2459 = vmul.f32 %v1222, %v2390
    %v2460 = vmul.f32 %v1567, %v2390
    %v2461 = vmul.f32 %v1224, %v2395
    %v2462 = vmul.f32 %v1569, %v2395
    %v2463 = vmul.f32 %v1227, %v2400
    %v2464 = vmul.f32 %v1572, %v2400
    %v2465 = vmul.f32 %v1229, %v2405
    %v2466 = vmul.f32 %v1574, %v2405
    %v2467 = vmul.f32 %v1232, %v2410
    %v2468 = vmul.f32 %v1577, %v2410
    %v2469 = vmul.f32 %v1234, %v2415
    %v2470 = vmul.f32 %v1579, %v2415
    %v2471 = vmul.f32 %v1237, %v2420
    %v2472 = vmul.f32 %v1582, %v2420
    %v2473 = vmul.f32 %v1239, %v2425
    %v2474 = vmul.f32 %v1584, %v2425
    %2476 = vset.pattern.permute.xlu0 0
    %2477 = vperm.xlu0 %2476, %v2283
    %v2478 = vpop.permute.xlu0 %2477
    %2481 = vset.pattern.permute.xlu0 0
    %2482 = vperm.xlu0 %2481, %v2284
    %v2483 = vpop.permute.xlu0 %2482
    %2486 = vset.pattern.permute.xlu0 0
    %2487 = vperm.xlu0 %2486, %v2285
    %v2488 = vpop.permute.xlu0 %2487
    %2491 = vset.pattern.permute.xlu0 0
    %2492 = vperm.xlu0 %2491, %v2286
    %v2493 = vpop.permute.xlu0 %2492
    %2496 = vset.pattern.permute.xlu0 0
    %2497 = vperm.xlu0 %2496, %v2287
    %v2498 = vpop.permute.xlu0 %2497
    %2501 = vset.pattern.permute.xlu0 0
    %2502 = vperm.xlu0 %2501, %v2288
    %v2503 = vpop.permute.xlu0 %2502
    %2506 = vset.pattern.permute.xlu0 0
    %2507 = vperm.xlu0 %2506, %v2289
    %v2508 = vpop.permute.xlu0 %2507
    %2511 = vset.pattern.permute.xlu0 0
    %2512 = vperm.xlu0 %2511, %v2290
    %v2513 = vpop.permute.xlu0 %2512
    %2516 = vset.pattern.permute.xlu0 0
    %2517 = vperm.xlu0 %2516, %v2291
    %v2518 = vpop.permute.xlu0 %2517
    %2521 = vset.pattern.permute.xlu0 0
    %2522 = vperm.xlu0 %2521, %v2292
    %v2523 = vpop.permute.xlu0 %2522
    %2526 = vset.pattern.permute.xlu0 0
    %2527 = vperm.xlu0 %2526, %v2293
    %v2528 = vpop.permute.xlu0 %2527
    %2531 = vset.pattern.permute.xlu0 0
    %2532 = vperm.xlu0 %2531, %v2294
    %v2533 = vpop.permute.xlu0 %2532
    %2536 = vset.pattern.permute.xlu0 0
    %2537 = vperm.xlu0 %2536, %v2295
    %v2538 = vpop.permute.xlu0 %2537
    %2541 = vset.pattern.permute.xlu0 0
    %2542 = vperm.xlu0 %2541, %v2296
    %v2543 = vpop.permute.xlu0 %2542
    %2546 = vset.pattern.permute.xlu0 0
    %2547 = vperm.xlu0 %2546, %v2297
    %v2548 = vpop.permute.xlu0 %2547
    %2551 = vset.pattern.permute.xlu0 0
    %2552 = vperm.xlu0 %2551, %v2298
    %v2553 = vpop.permute.xlu0 %2552
    %2556 = vset.pattern.permute.xlu0 0
    %2557 = vperm.xlu0 %2556, %v2299
    %v2558 = vpop.permute.xlu0 %2557
    %2561 = vset.pattern.permute.xlu0 0
    %2562 = vperm.xlu0 %2561, %v2300
    %v2563 = vpop.permute.xlu0 %2562
    %2566 = vset.pattern.permute.xlu0 0
    %2567 = vperm.xlu0 %2566, %v2301
    %v2568 = vpop.permute.xlu0 %2567
    %2571 = vset.pattern.permute.xlu0 0
    %2572 = vperm.xlu0 %2571, %v2302
    %v2573 = vpop.permute.xlu0 %2572
    %2576 = vset.pattern.permute.xlu0 0
    %2577 = vperm.xlu0 %2576, %v2303
    %v2578 = vpop.permute.xlu0 %2577
    %2581 = vset.pattern.permute.xlu0 0
    %2582 = vperm.xlu0 %2581, %v2304
    %v2583 = vpop.permute.xlu0 %2582
    %2586 = vset.pattern.permute.xlu0 0
    %2587 = vperm.xlu0 %2586, %v2305
    %v2588 = vpop.permute.xlu0 %2587
    %2591 = vset.pattern.permute.xlu0 0
    %2592 = vperm.xlu0 %2591, %v2306
    %v2593 = vpop.permute.xlu0 %2592
    %v2595 = vadd.f32 %v2427, %v2478
    %v2596 = vadd.f32 %v2428, %v2478
    %v2597 = vadd.f32 %v2429, %v2483
    %v2598 = vadd.f32 %v2430, %v2483
    %v2599 = vadd.f32 %v2431, %v2488
    %v2600 = vadd.f32 %v2432, %v2488
    %v2601 = vadd.f32 %v2433, %v2493
    %v2602 = vadd.f32 %v2434, %v2493
    %v2603 = vadd.f32 %v2435, %v2498
    %v2604 = vadd.f32 %v2436, %v2498
    %v2605 = vadd.f32 %v2437, %v2503
    %v2606 = vadd.f32 %v2438, %v2503
    %v2607 = vadd.f32 %v2439, %v2508
    %v2608 = vadd.f32 %v2440, %v2508
    %v2609 = vadd.f32 %v2441, %v2513
    %v2610 = vadd.f32 %v2442, %v2513
    %v2611 = vadd.f32 %v2443, %v2518
    %v2612 = vadd.f32 %v2444, %v2518
    %v2613 = vadd.f32 %v2445, %v2523
    %v2614 = vadd.f32 %v2446, %v2523
    %v2615 = vadd.f32 %v2447, %v2528
    %v2616 = vadd.f32 %v2448, %v2528
    %v2617 = vadd.f32 %v2449, %v2533
    %v2618 = vadd.f32 %v2450, %v2533
    %v2619 = vadd.f32 %v2451, %v2538
    %v2620 = vadd.f32 %v2452, %v2538
    %v2621 = vadd.f32 %v2453, %v2543
    %v2622 = vadd.f32 %v2454, %v2543
    %v2623 = vadd.f32 %v2455, %v2548
    %v2624 = vadd.f32 %v2456, %v2548
    %v2625 = vadd.f32 %v2457, %v2553
    %v2626 = vadd.f32 %v2458, %v2553
    %v2627 = vadd.f32 %v2459, %v2558
    %v2628 = vadd.f32 %v2460, %v2558
    %v2629 = vadd.f32 %v2461, %v2563
    %v2630 = vadd.f32 %v2462, %v2563
    %v2631 = vadd.f32 %v2463, %v2568
    %v2632 = vadd.f32 %v2464, %v2568
    %v2633 = vadd.f32 %v2465, %v2573
    %v2634 = vadd.f32 %v2466, %v2573
    %v2635 = vadd.f32 %v2467, %v2578
    %v2636 = vadd.f32 %v2468, %v2578
    %v2637 = vadd.f32 %v2469, %v2583
    %v2638 = vadd.f32 %v2470, %v2583
    %v2639 = vadd.f32 %v2471, %v2588
    %v2640 = vadd.f32 %v2472, %v2588
    %v2641 = vadd.f32 %v2473, %v2593
    %v2642 = vadd.f32 %v2474, %v2593
    %2643 = vst [vmem:[#allocation2] sm:$0xff] %v2595
    %2644 = vst.msk [vmem:[#allocation2 + $0x8] sm:$0xff] %vm1586, %v2596
    %2645 = vst [vmem:[#allocation2 + $0x10] sm:$0xff] %v2597
    %2646 = vst.msk [vmem:[#allocation2 + $0x18] sm:$0xff] %vm1586, %v2598
    %2647 = vst [vmem:[#allocation2 + $0x20] sm:$0xff] %v2599
    %2648 = vst.msk [vmem:[#allocation2 + $0x28] sm:$0xff] %vm1586, %v2600
    %2649 = vst [vmem:[#allocation2 + $0x30] sm:$0xff] %v2601
    %2650 = vst.msk [vmem:[#allocation2 + $0x38] sm:$0xff] %vm1586, %v2602
    %2651 = vst [vmem:[#allocation2 + $0x40] sm:$0xff] %v2603
    %2652 = vst.msk [vmem:[#allocation2 + $0x48] sm:$0xff] %vm1586, %v2604
    %2653 = vst [vmem:[#allocation2 + $0x50] sm:$0xff] %v2605
    %2654 = vst.msk [vmem:[#allocation2 + $0x58] sm:$0xff] %vm1586, %v2606
    %2655 = vst [vmem:[#allocation2 + $0x60] sm:$0xff] %v2607
    %2656 = vst.msk [vmem:[#allocation2 + $0x68] sm:$0xff] %vm1586, %v2608
    %2657 = vst [vmem:[#allocation2 + $0x70] sm:$0xff] %v2609
    %2658 = vst.msk [vmem:[#allocation2 + $0x78] sm:$0xff] %vm1586, %v2610
    %2659 = vst [vmem:[#allocation2 + $0x80] sm:$0xff] %v2611
    %2660 = vst.msk [vmem:[#allocation2 + $0x88] sm:$0xff] %vm1586, %v2612
    %2661 = vst [vmem:[#allocation2 + $0x90] sm:$0xff] %v2613
    %2662 = vst.msk [vmem:[#allocation2 + $0x98] sm:$0xff] %vm1586, %v2614
    %2663 = vst [vmem:[#allocation2 + $0xa0] sm:$0xff] %v2615
    %2664 = vst.msk [vmem:[#allocation2 + $0xa8] sm:$0xff] %vm1586, %v2616
    %2665 = vst [vmem:[#allocation2 + $0xb0] sm:$0xff] %v2617
    %2666 = vst.msk [vmem:[#allocation2 + $0xb8] sm:$0xff] %vm1586, %v2618
    %2667 = vst [vmem:[#allocation2 + $0xc0] sm:$0xff] %v2619
    %2668 = vst.msk [vmem:[#allocation2 + $0xc8] sm:$0xff] %vm1586, %v2620
    %2669 = vst [vmem:[#allocation2 + $0xd0] sm:$0xff] %v2621
    %2670 = vst.msk [vmem:[#allocation2 + $0xd8] sm:$0xff] %vm1586, %v2622
    %2671 = vst [vmem:[#allocation2 + $0xe0] sm:$0xff] %v2623
    %2672 = vst.msk [vmem:[#allocation2 + $0xe8] sm:$0xff] %vm1586, %v2624
    %2673 = vst [vmem:[#allocation2 + $0xf0] sm:$0xff] %v2625
    %2674 = vst.msk [vmem:[#allocation2 + $0xf8] sm:$0xff] %vm1586, %v2626
    %2675 = vst [vmem:[#allocation2 + $0x100] sm:$0xff] %v2627
    %2676 = vst.msk [vmem:[#allocation2 + $0x108] sm:$0xff] %vm1586, %v2628
    %2677 = vst [vmem:[#allocation2 + $0x110] sm:$0xff] %v2629
    %2678 = vst.msk [vmem:[#allocation2 + $0x118] sm:$0xff] %vm1586, %v2630
    %2679 = vst [vmem:[#allocation2 + $0x120] sm:$0xff] %v2631
    %2680 = vst.msk [vmem:[#allocation2 + $0x128] sm:$0xff] %vm1586, %v2632
    %2681 = vst [vmem:[#allocation2 + $0x130] sm:$0xff] %v2633
    %2682 = vst.msk [vmem:[#allocation2 + $0x138] sm:$0xff] %vm1586, %v2634
    %2683 = vst [vmem:[#allocation2 + $0x140] sm:$0xff] %v2635
    %2684 = vst.msk [vmem:[#allocation2 + $0x148] sm:$0xff] %vm1586, %v2636
    %2685 = vst [vmem:[#allocation2 + $0x150] sm:$0xff] %v2637
    %2686 = vst.msk [vmem:[#allocation2 + $0x158] sm:$0xff] %vm1586, %v2638
    %2687 = vst [vmem:[#allocation2 + $0x160] sm:$0xff] %v2639
    %2688 = vst.msk [vmem:[#allocation2 + $0x168] sm:$0xff] %vm1586, %v2640
    %2689 = vst [vmem:[#allocation2 + $0x170] sm:$0xff] %v2641
    %2690 = vst.msk [vmem:[#allocation2 + $0x178] sm:$0xff] %vm1586, %v2642
    // Predicated region
    $region18: #{tpu_custom_call.1} parent=1 // pred_check
      _
    $region19: #{tpu_custom_call.1} parent=1 // pred_check_branch
      %2692 = sbr.rel (0) target = $region21
    $region20: #{tpu_custom_call.1} parent=1 // pred_region
      %2694 = vsyncadd [#allocation3], 0
      %s2695 = sshll.u32 [#allocation2], 4
      %s2696 = int_to_ptr.vmem [resolvable:$true] %s2695
      %s2697 = sshll.u32 %s4, 4
      %s2698 = int_to_ptr.hbm [resolvable:$true] %s2697
      %2703 = dma.vmem_to_hbm [thread:$0]  %s2696, 6144, %s2698, [#allocation3], 256, 256, 16
    $region21: #{tpu_custom_call.1} parent=1 // pred_fallthru
      _
    // Predicated region
    $region22: #{tpu_custom_call.1} parent=1 // pred_check
      _
    $region23: #{tpu_custom_call.1} parent=1 // pred_check_branch
      %2705 = sbr.rel (0) target = $region25
    $region24: #{tpu_custom_call.1} parent=1 // pred_region
      %2707 = dma.done [#allocation3], 6144
    $region25: #{tpu_custom_call.1} parent=1 // pred_fallthru
      _
    %2708 = vsyncpa [#allocation3], 1

</llo_original>
